<compile_context>
chip_gen: v7x
topology: tpu7x:2x2x1
jax: 0.10.0
libtpu: 0.0.40
codegen_flags: <defaults>
</compile_context>

<pallas_src>
import functools
import math

import jax
import jax.numpy as jnp
from jax.experimental import pallas as pl
from jax.experimental.pallas import tpu as pltpu


# Set to jnp.bfloat16 on v6e/v7x for peak MXU rate (accumulation stays f32
# inside the kernels); kept f32 here so the demo matches the f32 reference.
_MXU_INPUT_DTYPE = jnp.float32

# 32 MiB scoped-VMEM request: within the v6e/v7x defaults (physical 128/64 MiB)
# and an explicit raise over v5e's 16 MiB default. All tiles here (weights +
# double-buffered activation tiles + intermediates) total well under 8 MiB.
_VMEM_LIMIT_BYTES = 32 * 1024 * 1024

_LAYERNORM_EPS = 1e-5            # torch nn.LayerNorm default
_MASK_FILL = -1e9                # torch masked_fill(mask == 0, -1000000000.0)


# ----------------------------------------------------------------------------
# helpers
# ----------------------------------------------------------------------------
def _pick_row_tile(m):
    """Row (sublane) tile for the flattened batch*seq axis.

    Prefer 256 (matches the 256-wide MXU of v6e/v7x, and is a multiple of the
    128-wide v5e MXU), then smaller 8-aligned tiles, then a single full block.
    """
    for tm in (256, 128, 64, 32, 16, 8):
        if m % tm == 0:
            return tm
    return m


def _resident_spec(shape, index_map, single_buffer):
    """BlockSpec for weights/biases whose block index is constant across the
    grid: single-buffer them so the pipeline does not allocate a useless
    second VMEM copy."""
    if single_buffer:
        return pl.BlockSpec(shape, index_map, pipeline_mode=pl.Buffered(1))
    return pl.BlockSpec(shape, index_map)


def _layernorm(y, gamma, beta):
    mu = jnp.mean(y, axis=-1, keepdims=True)
    var = jnp.mean(jnp.square(y - mu), axis=-1, keepdims=True)
    return (y - mu) * jax.lax.rsqrt(var + _LAYERNORM_EPS) * gamma + beta


# ----------------------------------------------------------------------------
# kernels
# ----------------------------------------------------------------------------
def _linear_kernel(x_ref, w_ref, b_ref, o_ref):
    y = jnp.dot(x_ref[...], w_ref[...], preferred_element_type=jnp.float32)
    o_ref[...] = (y + b_ref[...]).astype(o_ref.dtype)


def _attention_kernel(q_ref, k_ref, v_ref, mask_ref, o_ref, *, scale):
    # blocks: q (1,Sq,dh), k/v (1,Skv,dh), mask (1,Sq,Skv)
    q = q_ref[...]
    k = k_ref[...]
    v = v_ref[...]
    s = jnp.einsum("bqd,bkd->bqk", q, k,
                   preferred_element_type=jnp.float32) * scale
    s = jnp.where(mask_ref[...] == 0, _MASK_FILL, s)
    s = s - jnp.max(s, axis=-1, keepdims=True)
    p = jnp.exp(s)
    p = p / jnp.sum(p, axis=-1, keepdims=True)
    o = jnp.einsum("bqk,bkd->bqd", p.astype(v.dtype), v,
                   preferred_element_type=jnp.float32)
    o_ref[...] = o.astype(o_ref.dtype)


def _proj_add_norm_kernel(x_ref, w_ref, b_ref, r_ref, g_ref, bt_ref, o_ref):
    # w_concat projection + dropout(identity, eval) + residual + LayerNorm.
    y = jnp.dot(x_ref[...], w_ref[...],
                preferred_element_type=jnp.float32) + b_ref[...]
    y = y + r_ref[...].astype(jnp.float32)
    o_ref[...] = _layernorm(y, g_ref[...], bt_ref[...]).astype(o_ref.dtype)


def _ffn_add_norm_kernel(x_ref, w1_ref, b1_ref, w2_ref, b2_ref,
                         g_ref, bt_ref, o_ref):
    x = x_ref[...]
    h = jnp.dot(x, w1_ref[...], preferred_element_type=jnp.float32) + b1_ref[...]
    h = jnp.maximum(h, 0.0)                                   # ReLU
    # dropout (inside FFN) and dropout3 are identity in eval mode.
    # TODO(synk): train-mode dropout via pltpu.prng_seed / pltpu.prng_random_bits.
    # TODO(synk): for large hidden (e.g. 4*d_model), chunk the H axis with
    # lax.fori_loop accumulating into a (TM, D) f32 scratch to bound the live
    # (TM, H) intermediate.
    y = jnp.dot(h.astype(w2_ref.dtype), w2_ref[...],
                preferred_element_type=jnp.float32) + b2_ref[...]
    y = y + x.astype(jnp.float32)                             # residual
    o_ref[...] = _layernorm(y, g_ref[...], bt_ref[...]).astype(o_ref.dtype)


# ----------------------------------------------------------------------------
# pallas_call wrappers
# ----------------------------------------------------------------------------
def _linear(x2d, w, b, single_buffer):
    m, d_in = x2d.shape
    d_out = w.shape[1]
    tm = _pick_row_tile(m)
    cost = pl.CostEstimate(
        flops=2 * m * d_in * d_out,
        transcendentals=0,
        bytes_accessed=4 * (m * d_in + d_in * d_out + d_out + m * d_out))
    return pl.pallas_call(
        _linear_kernel,
        out_shape=jax.ShapeDtypeStruct((m, d_out), jnp.float32),
        grid_spec=pltpu.PrefetchScalarGridSpec(
            num_scalar_prefetch=0,
            grid=(m // tm,),
            in_specs=[
                pl.BlockSpec((tm, d_in), lambda i: (i, 0)),
                _resident_spec((d_in, d_out), lambda i: (0, 0), single_buffer),
                _resident_spec((1, d_out), lambda i: (0, 0), single_buffer),
            ],
            out_specs=pl.BlockSpec((tm, d_out), lambda i: (i, 0)),
        ),
        compiler_params=pltpu.CompilerParams(
            dimension_semantics=("parallel",),
            vmem_limit_bytes=_VMEM_LIMIT_BYTES),
        cost_estimate=cost,
    )(x2d.astype(_MXU_INPUT_DTYPE), w.astype(_MXU_INPUT_DTYPE),
      b.reshape(1, d_out).astype(jnp.float32))


def _attention(qh, kh, vh, mask, n_head):
    bh, sq, dh = qh.shape
    skv = kh.shape[1]
    kernel = functools.partial(_attention_kernel, scale=1.0 / math.sqrt(dh))
    cost = pl.CostEstimate(
        flops=4 * bh * sq * skv * dh,
        transcendentals=bh * sq * skv,
        bytes_accessed=4 * (bh * (sq + 2 * skv) * dh
                            + (bh // n_head) * sq * skv + bh * sq * dh))
    return pl.pallas_call(
        kernel,
        out_shape=jax.ShapeDtypeStruct((bh, sq, dh), jnp.float32),
        grid_spec=pltpu.PrefetchScalarGridSpec(
            num_scalar_prefetch=0,
            grid=(bh,),
            in_specs=[
                pl.BlockSpec((1, sq, dh), lambda i: (i, 0, 0)),
                pl.BlockSpec((1, skv, dh), lambda i: (i, 0, 0)),
                pl.BlockSpec((1, skv, dh), lambda i: (i, 0, 0)),
                pl.BlockSpec((1, sq, skv), lambda i: (i // n_head, 0, 0)),
            ],
            out_specs=pl.BlockSpec((1, sq, dh), lambda i: (i, 0, 0)),
        ),
        compiler_params=pltpu.CompilerParams(
            dimension_semantics=("parallel",),
            vmem_limit_bytes=_VMEM_LIMIT_BYTES),
        cost_estimate=cost,
    )(qh.astype(_MXU_INPUT_DTYPE), kh.astype(_MXU_INPUT_DTYPE),
      vh.astype(_MXU_INPUT_DTYPE), mask)


def _proj_add_norm(ctx, w, b, residual, gamma, beta, single_buffer):
    bsz, s, d = ctx.shape
    m = bsz * s
    tm = _pick_row_tile(m)
    x2d = ctx.reshape(m, d)
    r2d = residual.reshape(m, d)
    cost = pl.CostEstimate(
        flops=2 * m * d * d + 10 * m * d,
        transcendentals=m,
        bytes_accessed=4 * (3 * m * d + d * d + 3 * d))
    out2d = pl.pallas_call(
        _proj_add_norm_kernel,
        out_shape=jax.ShapeDtypeStruct((m, d), jnp.float32),
        grid_spec=pltpu.PrefetchScalarGridSpec(
            num_scalar_prefetch=0,
            grid=(m // tm,),
            in_specs=[
                pl.BlockSpec((tm, d), lambda i: (i, 0)),
                _resident_spec((d, d), lambda i: (0, 0), single_buffer),
                _resident_spec((1, d), lambda i: (0, 0), single_buffer),
                pl.BlockSpec((tm, d), lambda i: (i, 0)),
                _resident_spec((1, d), lambda i: (0, 0), single_buffer),
                _resident_spec((1, d), lambda i: (0, 0), single_buffer),
            ],
            out_specs=pl.BlockSpec((tm, d), lambda i: (i, 0)),
        ),
        compiler_params=pltpu.CompilerParams(
            dimension_semantics=("parallel",),
            vmem_limit_bytes=_VMEM_LIMIT_BYTES),
        cost_estimate=cost,
    )(x2d.astype(_MXU_INPUT_DTYPE), w.astype(_MXU_INPUT_DTYPE),
      b.reshape(1, d), r2d, gamma.reshape(1, d), beta.reshape(1, d))
    return out2d.reshape(bsz, s, d)


def _ffn_add_norm(x, ffn, ln, single_buffer):
    bsz, s, d = x.shape
    m = bsz * s
    h = ffn["w1"].shape[1]
    tm = _pick_row_tile(m)
    x2d = x.reshape(m, d)
    cost = pl.CostEstimate(
        flops=4 * m * d * h + 10 * m * d,
        transcendentals=m,
        bytes_accessed=4 * (2 * m * d + 2 * d * h + h + 3 * d))
    out2d = pl.pallas_call(
        _ffn_add_norm_kernel,
        out_shape=jax.ShapeDtypeStruct((m, d), jnp.float32),
        grid_spec=pltpu.PrefetchScalarGridSpec(
            num_scalar_prefetch=0,
            grid=(m // tm,),
            in_specs=[
                pl.BlockSpec((tm, d), lambda i: (i, 0)),
                _resident_spec((d, h), lambda i: (0, 0), single_buffer),
                _resident_spec((1, h), lambda i: (0, 0), single_buffer),
                _resident_spec((h, d), lambda i: (0, 0), single_buffer),
                _resident_spec((1, d), lambda i: (0, 0), single_buffer),
                _resident_spec((1, d), lambda i: (0, 0), single_buffer),
                _resident_spec((1, d), lambda i: (0, 0), single_buffer),
            ],
            out_specs=pl.BlockSpec((tm, d), lambda i: (i, 0)),
        ),
        compiler_params=pltpu.CompilerParams(
            dimension_semantics=("parallel",),
            vmem_limit_bytes=_VMEM_LIMIT_BYTES),
        cost_estimate=cost,
    )(x2d.astype(_MXU_INPUT_DTYPE), ffn["w1"].astype(_MXU_INPUT_DTYPE),
      ffn["b1"].reshape(1, h), ffn["w2"].astype(_MXU_INPUT_DTYPE),
      ffn["b2"].reshape(1, d), ln["gamma"].reshape(1, d), ln["beta"].reshape(1, d))
    return out2d.reshape(bsz, s, d)


def _mha_context(xq, xkv, p, mask, n_head, single_buffer):
    """Multi-head attention up to (but excluding) the w_concat projection."""
    bsz, sq, d = xq.shape
    skv = xkv.shape[1]
    dh = d // n_head

    if xq is xkv:
        # self-attention: fuse Q/K/V projections into a single matmul
        w_qkv = jnp.concatenate([p["wq"], p["wk"], p["wv"]], axis=1)
        b_qkv = jnp.concatenate([p["bq"], p["bk"], p["bv"]])
        qkv = _linear(xq.reshape(bsz * sq, d), w_qkv, b_qkv, single_buffer)
        q, k, v = jnp.split(qkv, 3, axis=1)
    else:
        q = _linear(xq.reshape(bsz * sq, d), p["wq"], p["bq"], single_buffer)
        w_kv = jnp.concatenate([p["wk"], p["wv"]], axis=1)
        b_kv = jnp.concatenate([p["bk"], p["bv"]])
        kv = _linear(xkv.reshape(bsz * skv, d), w_kv, b_kv, single_buffer)
        k, v = jnp.split(kv, 2, axis=1)

    # Head split/concat is wrapper-side layout plumbing (cheap XLA ops).
    def split_heads(t, s):
        t = t.reshape(bsz, s, n_head, dh)
        return jnp.transpose(t, (0, 2, 1, 3)).reshape(bsz * n_head, s, dh)

    qh = split_heads(q, sq)
    kh = split_heads(k, skv)
    vh = split_heads(v, skv)

    if mask is None:
        mask = jnp.ones((bsz, sq, skv), jnp.float32)

    ctx = _attention(qh, kh, vh, mask, n_head)                 # (B*H, Sq, dh)
    ctx = jnp.transpose(ctx.reshape(bsz, n_head, sq, dh), (0, 2, 1, 3))
    return ctx.reshape(bsz, sq, d)                             # head concat


def _decoder_layer_forward(params, dec, enc, t_mask, s_mask, single_buffer):
    n_head = params["n_head"]

    # self attention + dropout1(identity) + add & norm1
    sa = params["self_attn"]
    ctx = _mha_context(dec, dec, sa, t_mask, n_head, single_buffer)
    x = _proj_add_norm(ctx, sa["wo"], sa["bo"], dec,
                       params["norm1"]["gamma"], params["norm1"]["beta"],
                       single_buffer)

    # encoder-decoder attention + dropout2(identity) + add & norm2
    if enc is not None:
        eda = params["enc_dec_attn"]
        ctx = _mha_context(x, enc, eda, s_mask, n_head, single_buffer)
        x = _proj_add_norm(ctx, eda["wo"], eda["bo"], x,
                           params["norm2"]["gamma"], params["norm2"]["beta"],
                           single_buffer)

    # positionwise FFN + dropout3(identity) + add & norm3
    x = _ffn_add_norm(x, params["ffn"], params["norm3"], single_buffer)
    return x


def decoder_layer_forward(params, dec, enc=None, t_mask=None, s_mask=None):
    try:
        return _decoder_layer_forward(params, dec, enc, t_mask, s_mask,
                                      single_buffer=True)
    except Exception:
        # pl.Buffered(1) (single-buffered resident weights) unsupported on this
        # Pallas build — rerun with default double-buffered BlockSpecs.
        return _decoder_layer_forward(params, dec, enc, t_mask, s_mask,
                                      single_buffer=False)


# ----------------------------------------------------------------------------
# pure-JAX reference (mirrors the PyTorch module in eval mode)
# ----------------------------------------------------------------------------
def _ref_layernorm(x, gamma, beta):
    mu = x.mean(-1, keepdims=True)
    var = ((x - mu) ** 2).mean(-1, keepdims=True)
    return (x - mu) / jnp.sqrt(var + _LAYERNORM_EPS) * gamma + beta


def _ref_mha(xq, xkv, p, mask, n_head):
    bsz, sq, d = xq.shape
    skv = xkv.shape[1]
    dh = d // n_head
    q = xq @ p["wq"] + p["bq"]
    k = xkv @ p["wk"] + p["bk"]
    v = xkv @ p["wv"] + p["bv"]

    def split(t, s):
        return jnp.transpose(t.reshape(bsz, s, n_head, dh), (0, 2, 1, 3))

    q, k, v = split(q, sq), split(k, skv), split(v, skv)
    s = jnp.einsum("bhqd,bhkd->bhqk", q, k) / math.sqrt(dh)
    if mask is not None:
        s = jnp.where(mask[:, None, :, :] == 0, _MASK_FILL, s)
    a = jax.nn.softmax(s, axis=-1)
    ctx = jnp.einsum("bhqk,bhkd->bhqd", a, v)
    ctx = jnp.transpose(ctx, (0, 2, 1, 3)).reshape(bsz, sq, d)
    return ctx @ p["wo"] + p["bo"]


def reference_decoder_layer(params, dec, enc, t_mask, s_mask):
    n_head = params["n_head"]
    x = _ref_mha(dec, dec, params["self_attn"], t_mask, n_head)
    x = _ref_layernorm(x + dec, params["norm1"]["gamma"], params["norm1"]["beta"])
    if enc is not None:
        res = x
        x = _ref_mha(x, enc, params["enc_dec_attn"], s_mask, n_head)
        x = _ref_layernorm(x + res, params["norm2"]["gamma"], params["norm2"]["beta"])
    res = x
    h = jnp.maximum(x @ params["ffn"]["w1"] + params["ffn"]["b1"], 0.0)
    y = h @ params["ffn"]["w2"] + params["ffn"]["b2"]
    return _ref_layernorm(y + res, params["norm3"]["gamma"], params["norm3"]["beta"])


# ----------------------------------------------------------------------------
# demo
# ----------------------------------------------------------------------------
if __name__ == "__main__":
    # Small but lane-aligned shapes: d_model / ffn_hidden are multiples of 128
    # so every block is lane-dense (the review flagged 16/32-wide features as
    # pure padding + masked stores on TPU).
    d_model, n_head, ffn_hidden = 128, 4, 256
    batch, seq_dec, seq_enc = 2, 256, 128

    key = jax.random.PRNGKey(0)
    kit = iter(jax.random.split(key, 24))

    def linear_init(fan_in, fan_out):
        bound = 1.0 / math.sqrt(fan_in)
        w = jax.random.uniform(next(kit), (fan_in, fan_out), jnp.float32, -bound, bound)
        b = jax.random.uniform(next(kit), (fan_out,), jnp.float32, -bound, bound)
        return w, b

    def mha_init():
        wq, bq = linear_init(d_model, d_model)
        wk, bk = linear_init(d_model, d_model)
        wv, bv = linear_init(d_model, d_model)
        wo, bo = linear_init(d_model, d_model)
        return {"wq": wq, "bq": bq, "wk": wk, "bk": bk,
                "wv": wv, "bv": bv, "wo": wo, "bo": bo}

    def norm_init():
        return {"gamma": jnp.ones((d_model,), jnp.float32),
                "beta": jnp.zeros((d_model,), jnp.float32)}

    w1, b1 = linear_init(d_model, ffn_hidden)
    w2, b2 = linear_init(ffn_hidden, d_model)
    params = {
        "n_head": n_head,
        "self_attn": mha_init(),
        "norm1": norm_init(),
        "enc_dec_attn": mha_init(),
        "norm2": norm_init(),
        "ffn": {"w1": w1, "b1": b1, "w2": w2, "b2": b2},
        "norm3": norm_init(),
    }

    dec = jax.random.normal(next(kit), (batch, seq_dec, d_model), jnp.float32)
    enc = jax.random.normal(next(kit), (batch, seq_enc, d_model), jnp.float32)

    t_mask = jnp.broadcast_to(
        jnp.tril(jnp.ones((seq_dec, seq_dec), jnp.float32)),
        (batch, seq_dec, seq_dec))
    s_mask = jnp.ones((batch, seq_dec, seq_enc), jnp.float32)

    out = decoder_layer_forward(params, dec, enc, t_mask, s_mask)
    out = jax.block_until_ready(out)

    ref = reference_decoder_layer(params, dec, enc, t_mask, s_mask)
    assert out.shape == (batch, seq_dec, d_model)
    max_err = float(jnp.max(jnp.abs(out - ref)))
    assert jnp.allclose(out, ref, atol=2e-4, rtol=2e-4), f"max_abs_err={max_err}"

    print("KERNEL_OK")
</pallas_src>

<mosaic_0001>
module attributes {stable_mosaic.version = 11 : i64} {
  func.func @_linear_kernel(%arg0: i32, %arg1: memref<256x128xf32, #tpu.memory_space<vmem>>, %arg2: memref<128x384xf32, #tpu.memory_space<vmem>>, %arg3: memref<1x384xf32, #tpu.memory_space<vmem>>, %arg4: memref<256x384xf32, #tpu.memory_space<vmem>>) attributes {dimension_semantics = [#tpu.dimension_semantics<parallel>], iteration_bounds = array<i64: 2>, scalar_prefetch = 0 : i64, scratch_operands = 0 : i64, tpu.core_type = #tpu.core_type<tc>, window_params = [{transform_indices = @transform_0, window_bounds = array<i64: 256, 128>}, {pipeline_mode = #tpu.pipeline_mode<synchronous>, transform_indices = @transform_1, window_bounds = array<i64: 128, 384>}, {pipeline_mode = #tpu.pipeline_mode<synchronous>, transform_indices = @transform_2, window_bounds = array<i64: 1, 384>}, {transform_indices = @transform_3, window_bounds = array<i64: 256, 384>}]} {
    %c0 = arith.constant 0 : index
    %c0_0 = arith.constant 0 : index
    %0 = vector.load %arg1[%c0, %c0_0] : memref<256x128xf32, #tpu.memory_space<vmem>>, vector<256x128xf32>
    %c0_1 = arith.constant 0 : index
    %c0_2 = arith.constant 0 : index
    %1 = vector.load %arg2[%c0_1, %c0_2] : memref<128x384xf32, #tpu.memory_space<vmem>>, vector<128x384xf32>
    %cst = arith.constant dense<0.000000e+00> : vector<256x384xf32>
    %2 = tpu.matmul %0, %1, %cst {dimension_numbers = #tpu.dot_dimension_numbers<[1], [0], [0], [1], [0, 0, 1, 1], [], []>} : vector<256x128xf32>, vector<128x384xf32>, vector<256x384xf32> -> vector<256x384xf32>
    %c0_3 = arith.constant 0 : index
    %c0_4 = arith.constant 0 : index
    %3 = vector.load %arg3[%c0_3, %c0_4] : memref<1x384xf32, #tpu.memory_space<vmem>>, vector<1x384xf32>
    %4 = vector.broadcast %3 : vector<1x384xf32> to vector<256x384xf32>
    %5 = arith.addf %2, %4 : vector<256x384xf32>
    %c0_5 = arith.constant 0 : index
    %c0_6 = arith.constant 0 : index
    %6 = vector.load %arg4[%c0_5, %c0_6] : memref<256x384xf32, #tpu.memory_space<vmem>>, vector<256x384xf32>
    tpu.vector_store %arg4[%c0_5, %c0_6], %5 {strides = array<i32>} : memref<256x384xf32, #tpu.memory_space<vmem>>, vector<256x384xf32>,
    return
  }
  func.func @transform_0(%arg0: i32) -> (i32, i32) {
    %c0_i32 = arith.constant 0 : i32
    %c0_i32_0 = arith.constant 0 : i32
    return %arg0, %c0_i32 : i32, i32
  }
  func.func @transform_1(%arg0: i32) -> (i32, i32) {
    %c0_i32 = arith.constant 0 : i32
    %c0_i32_0 = arith.constant 0 : i32
    %c0_i32_1 = arith.constant 0 : i32
    return %c0_i32, %c0_i32_0 : i32, i32
  }
  func.func @transform_2(%arg0: i32) -> (i32, i32) {
    %c0_i32 = arith.constant 0 : i32
    %c0_i32_0 = arith.constant 0 : i32
    %c0_i32_1 = arith.constant 0 : i32
    return %c0_i32, %c0_i32_0 : i32, i32
  }
  func.func @transform_3(%arg0: i32) -> (i32, i32) {
    %c0_i32 = arith.constant 0 : i32
    %c0_i32_0 = arith.constant 0 : i32
    return %arg0, %c0_i32 : i32, i32
  }
}

module attributes {stable_mosaic.version = 11 : i64} {
  func.func @_linear_kernel(%arg0: i32, %arg1: memref<256x128xf32, #tpu.memory_space<vmem>>, %arg2: memref<128x384xf32, #tpu.memory_space<vmem>>, %arg3: memref<1x384xf32, #tpu.memory_space<vmem>>, %arg4: memref<256x384xf32, #tpu.memory_space<vmem>>) attributes {dimension_semantics = [#tpu.dimension_semantics<parallel>], iteration_bounds = array<i64: 2>, scalar_prefetch = 0 : i64, scratch_operands = 0 : i64, tpu.core_type = #tpu.core_type<tc>, window_params = [{transform_indices = @transform_0, window_bounds = array<i64: 256, 128>}, {pipeline_mode = #tpu.pipeline_mode<synchronous>, transform_indices = @transform_1, window_bounds = array<i64: 128, 384>}, {pipeline_mode = #tpu.pipeline_mode<synchronous>, transform_indices = @transform_2, window_bounds = array<i64: 1, 384>}, {transform_indices = @transform_3, window_bounds = array<i64: 256, 384>}]} {
    %c0 = arith.constant 0 : index
    %c0_0 = arith.constant 0 : index
    %0 = vector.load %arg1[%c0, %c0_0] : memref<256x128xf32, #tpu.memory_space<vmem>>, vector<256x128xf32>
    %c0_1 = arith.constant 0 : index
    %c0_2 = arith.constant 0 : index
    %1 = vector.load %arg2[%c0_1, %c0_2] : memref<128x384xf32, #tpu.memory_space<vmem>>, vector<128x384xf32>
    %cst = arith.constant dense<0.000000e+00> : vector<256x384xf32>
    %2 = tpu.matmul %0, %1, %cst {dimension_numbers = #tpu.dot_dimension_numbers<[1], [0], [0], [1], [0, 0, 1, 1], [], []>} : vector<256x128xf32>, vector<128x384xf32>, vector<256x384xf32> -> vector<256x384xf32>
    %c0_3 = arith.constant 0 : index
    %c0_4 = arith.constant 0 : index
    %3 = vector.load %arg3[%c0_3, %c0_4] : memref<1x384xf32, #tpu.memory_space<vmem>>, vector<1x384xf32>
    %4 = vector.broadcast %3 : vector<1x384xf32> to vector<256x384xf32>
    %5 = arith.addf %2, %4 : vector<256x384xf32>
    %c0_5 = arith.constant 0 : index
    %c0_6 = arith.constant 0 : index
    %6 = vector.load %arg4[%c0_5, %c0_6] : memref<256x384xf32, #tpu.memory_space<vmem>>, vector<256x384xf32>
    tpu.vector_store %arg4[%c0_5, %c0_6], %5 {strides = array<i32>} : memref<256x384xf32, #tpu.memory_space<vmem>>, vector<256x384xf32>,
    return
  }
  func.func @transform_0(%arg0: i32) -> (i32, i32) {
    %c0_i32 = arith.constant 0 : i32
    %c0_i32_0 = arith.constant 0 : i32
    return %arg0, %c0_i32 : i32, i32
  }
  func.func @transform_1(%arg0: i32) -> (i32, i32) {
    %c0_i32 = arith.constant 0 : i32
    %c0_i32_0 = arith.constant 0 : i32
    %c0_i32_1 = arith.constant 0 : i32
    return %c0_i32, %c0_i32_0 : i32, i32
  }
  func.func @transform_2(%arg0: i32) -> (i32, i32) {
    %c0_i32 = arith.constant 0 : i32
    %c0_i32_0 = arith.constant 0 : i32
    %c0_i32_1 = arith.constant 0 : i32
    return %c0_i32, %c0_i32_0 : i32, i32
  }
  func.func @transform_3(%arg0: i32) -> (i32, i32) {
    %c0_i32 = arith.constant 0 : i32
    %c0_i32_0 = arith.constant 0 : i32
    return %arg0, %c0_i32 : i32, i32
  }
}

</mosaic_0001>

<llo_original>
// kernel: tpu_custom_call.1
$region0: #{tpu_custom_call.1}
  #allocation0 [shape = 'u32[]', space=smem, size = 0x4, offset = 0x4, fixed_abs, tag = 'smem constant byte address 0x4 - core index']
  #allocation1 [shape = 'u32[144,128]{1,0:T(1,128)}', space=vmem, size = 0x12000, scoped, tag = 'internal scratch']
  %s0 = inlined_call_operand.hbm [shape: f32[512,128], index: 0, kind: input, shape index: {}]
  %s1 = inlined_call_operand.hbm [shape: f32[128,384], index: 1, kind: input, shape index: {}]
  %s2 = inlined_call_operand.vmem [shape: f32[1,384], index: 2, kind: input, shape index: {}]
  %s3 = inlined_call_operand.hbm [shape: f32[512,384], index: 3, kind: output, shape index: {}]
  %s4 = sld [smem:[#allocation0]]
  $region53: #{tpu_custom_call.1} parent=0
    _
  %s6 = ssub.s32 1, %s4
  %s7 = scalar_select 0, %s6, %s4
  $region1: #{tpu_custom_call.1} parent=0
    #allocation2 [shape = 'u8[262144]{0}', space=vmem, size = 0x40000, scoped, tag = 'input window, operand 0']
    #allocation3 [shape = 's32[2]{0}', space=sflag, size = 0x8, scoped, tag = 'scoped memory for tpu_custom_call.1']
    #allocation4 [shape = 's32[2]{0}', space=sflag, size = 0x8, scoped, tag = 'scoped memory for tpu_custom_call.1']
    #allocation5 [shape = 'u8[196608]{0}', space=vmem, size = 0x30000, scoped, tag = 'input window, operand 1, single buffered']
    #allocation6 [shape = 's32[1]{0}', space=sflag, size = 0x4, scoped, tag = 'scoped memory for tpu_custom_call.1']
    #allocation7 [shape = 'u8[786432]{0}', space=vmem, size = 0xc0000, scoped, tag = 'output window, operand 0']
    %8 = vsyncpa [#allocation3], 0
    %s9 = scalar_lea.sflag [#allocation3], 1
    %10 = vsyncpa %s9, 0
    %11 = vsyncpa [#allocation6], 0
    %12 = vsyncpa [#allocation4], 0
    %s13 = scalar_lea.sflag [#allocation4], 1
    %14 = vsyncpa %s13, 0
    loop: start=0, step=1, limit=4
    $region2: #{tpu_custom_call.1} parent=1 // loop_pre_header
      _
    $region3: #{tpu_custom_call.1} parent=1 // loop_header
      %s16 = sphi 0, %s20
      %p17 = scmp.ge.s32.totalorder %s16, 4
      %s26 = sphi 0, %s28
      %s29 = sphi 0, %s26
      %s30 = sphi 0, %s29
      %s46 = sphi 0, %s30
      %s50 = sphi 0, %s50
      %s52 = sphi 0, %s50
      %s53 = sphi 0, %s52
      %s67 = sphi 0, %s53
      %s71 = sphi 0, %s71
      %s73 = sphi 0, %s71
      %s74 = sphi 0, %s73
      %s88 = sphi 0, %s74
      %s94 = sphi 0, %s96
      %s97 = sphi 0, %s94
      %s98 = sphi 0, %s97
      %s114 = sphi 0, %s98
    $region4: #{tpu_custom_call.1} parent=1 // loop_header_branch
      %19 = sbr.rel (%p17) target = $region8
    $region5: #{tpu_custom_call.1} parent=1 // loop_body
      %s21 = ssub.s32 %s16, 1
      %s22 = ssub.s32 %s16, 2
      %s23 = sadd.s32 %s16, 1
      %s24 = ssub.s32 %s16, %s23
      %p25 = scmp.eq.s32.totalorder %s24, 0
      %s27 = sadd.s32 %s26, 1
      %s28 = scalar_select %p25, %s26, %s27
      %p31 = pneg %p25
      %p32 = scmp.eq.s32.totalorder %s16, 1
      %p33 = por %p31, %p32
      %p34 = scmp.ne.s32.totalorder %s26, %s29
      %p35 = scmp.eq.s32.totalorder %s16, 0
      %p36 = por %p34, %p35
      %p37 = scmp.ne.s32.totalorder %s26, %s29
      %p38 = scmp.eq.s32.totalorder %s21, 1
      %p39 = por %p37, %p38
      %p40 = scmp.ne.s32.totalorder %s29, %s30
      %p41 = scmp.eq.s32.totalorder %s21, 0
      %p42 = por %p40, %p41
      %p43 = scmp.ne.s32.totalorder %s29, %s30
      %p44 = scmp.eq.s32.totalorder %s22, 1
      %p45 = por %p43, %p44
      %p47 = scmp.ne.s32.totalorder %s30, %s46
      %p48 = scmp.eq.s32.totalorder %s22, 0
      %p49 = por %p47, %p48
      %s51 = sadd.s32 %s50, 1
      %p54 = scmp.eq.s32.totalorder %s16, 1
      %p55 = scmp.ne.s32.totalorder %s50, %s52
      %p56 = scmp.eq.s32.totalorder %s16, 0
      %p57 = por %p55, %p56
      %p58 = scmp.ne.s32.totalorder %s50, %s52
      %p59 = scmp.eq.s32.totalorder %s21, 1
      %p60 = por %p58, %p59
      %p61 = scmp.ne.s32.totalorder %s52, %s53
      %p62 = scmp.eq.s32.totalorder %s21, 0
      %p63 = por %p61, %p62
      %p64 = scmp.ne.s32.totalorder %s52, %s53
      %p65 = scmp.eq.s32.totalorder %s22, 1
      %p66 = por %p64, %p65
      %p68 = scmp.ne.s32.totalorder %s53, %s67
      %p69 = scmp.eq.s32.totalorder %s22, 0
      %p70 = por %p68, %p69
      %s72 = sadd.s32 %s71, 1
      %p75 = scmp.eq.s32.totalorder %s16, 1
      %p76 = scmp.ne.s32.totalorder %s71, %s73
      %p77 = scmp.eq.s32.totalorder %s16, 0
      %p78 = por %p76, %p77
      %p79 = scmp.ne.s32.totalorder %s71, %s73
      %p80 = scmp.eq.s32.totalorder %s21, 1
      %p81 = por %p79, %p80
      %p82 = scmp.ne.s32.totalorder %s73, %s74
      %p83 = scmp.eq.s32.totalorder %s21, 0
      %p84 = por %p82, %p83
      %p85 = scmp.ne.s32.totalorder %s73, %s74
      %p86 = scmp.eq.s32.totalorder %s22, 1
      %p87 = por %p85, %p86
      %p89 = scmp.ne.s32.totalorder %s74, %s88
      %p90 = scmp.eq.s32.totalorder %s22, 0
      %p91 = por %p89, %p90
      %s92 = ssub.s32 %s16, %s23
      %p93 = scmp.eq.s32.totalorder %s92, 0
      %s95 = sadd.s32 %s94, 1
      %s96 = scalar_select %p93, %s94, %s95
      %p99 = pneg %p93
      %p100 = scmp.eq.s32.totalorder %s16, 1
      %p101 = por %p99, %p100
      %p102 = scmp.ne.s32.totalorder %s94, %s97
      %p103 = scmp.eq.s32.totalorder %s16, 0
      %p104 = por %p102, %p103
      %p105 = scmp.ne.s32.totalorder %s94, %s97
      %p106 = scmp.eq.s32.totalorder %s21, 1
      %p107 = por %p105, %p106
      %p108 = scmp.ne.s32.totalorder %s97, %s98
      %p109 = scmp.eq.s32.totalorder %s21, 0
      %p110 = por %p108, %p109
      %p111 = scmp.ne.s32.totalorder %s97, %s98
      %p112 = scmp.eq.s32.totalorder %s22, 1
      %p113 = por %p111, %p112
      %p115 = scmp.ne.s32.totalorder %s98, %s114
      %p116 = scmp.eq.s32.totalorder %s22, 0
      %p117 = por %p115, %p116
      %p118 = scmp.le.s32.totalorder 1, %s16
      %p119 = scmp.lt.s32.totalorder %s16, 3
      %p120 = pnand %p118, %p119
      %p121 = pneg %p120
      // Predicated region
      $region9: #{tpu_custom_call.1} parent=5 // pred_check
        _
      $region10: #{tpu_custom_call.1} parent=5 // pred_check_branch
        %123 = sbr.rel (%p120) target = $region12
      $region11: #{tpu_custom_call.1} parent=5 // pred_region
        %s124 = ssub.s32 %s16, 1
        // Predicated region
        $region13: #{tpu_custom_call.1} parent=11 // pred_check
          %p125 = pneg %p63
        $region14: #{tpu_custom_call.1} parent=11 // pred_check_branch
          %127 = sbr.rel (%p125) target = $region16
        $region15: #{tpu_custom_call.1} parent=11 // pred_region
          %s129 = ssub.s32 6144, 6144
          %130 = vsyncadd [#allocation6], %s129
          %s131 = sshll.u32 [#allocation5], 4
          %s132 = int_to_ptr.vmem [resolvable:$true] %s131
          %137 = dma.hbm_to_vmem [thread:$0]  %s1, 6144, %s132, [#allocation6], 384, 384, 24
        $region16: #{tpu_custom_call.1} parent=11 // pred_fallthru
          _
        // Predicated region
        $region17: #{tpu_custom_call.1} parent=11 // pred_check
          %p138 = pneg %p84
        $region18: #{tpu_custom_call.1} parent=11 // pred_check_branch
          %140 = sbr.rel (%p138) target = $region20
        $region19: #{tpu_custom_call.1} parent=11 // pred_region
          _
        $region20: #{tpu_custom_call.1} parent=11 // pred_fallthru
          _
      $region12: #{tpu_custom_call.1} parent=5 // pred_fallthru
        _
      %p141 = scmp.lt.s32.totalorder %s16, 2
      // Predicated region
      $region21: #{tpu_custom_call.1} parent=5 // pred_check
        %p142 = pneg %p141
      $region22: #{tpu_custom_call.1} parent=5 // pred_check_branch
        %144 = sbr.rel (%p142) target = $region24
      $region23: #{tpu_custom_call.1} parent=5 // pred_region
        // Predicated region
        $region25: #{tpu_custom_call.1} parent=23 // pred_check
          %p145 = pneg %p36
        $region26: #{tpu_custom_call.1} parent=23 // pred_check_branch
          %147 = sbr.rel (%p145) target = $region28
        $region27: #{tpu_custom_call.1} parent=23 // pred_region
          %s148 = sand.u32 %s26, 1
          %s149 = scalar_lea.sflag [#allocation3], %s148
          %s150 = sand.u32 %s26, 1
          %s151 = smul.addr %s150, 256
          %s152 = scalar_lea.vmem [#allocation2], %s151
          %s153 = smul.u32 32, %s16
          %s155 = ssub.s32 4096, 4096
          %156 = vsyncadd %s149, %s155
          %s157 = smul.addr %s153, 128
          %s158 = scalar_lea.hbm %s0, %s157
          %s159 = sshll.u32 %s152, 4
          %s160 = int_to_ptr.vmem [resolvable:$true] %s159
          %165 = dma.hbm_to_vmem [thread:$0]  %s158, 4096, %s160, %s149, 128, 128, 8
        $region28: #{tpu_custom_call.1} parent=23 // pred_fallthru
          _
      $region24: #{tpu_custom_call.1} parent=5 // pred_fallthru
        _
      %p166 = scmp.le.s32.totalorder 1, %s16
      %p167 = scmp.lt.s32.totalorder %s16, 3
      %p168 = pnand %p166, %p167
      %p169 = pneg %p168
      // Predicated region
      $region29: #{tpu_custom_call.1} parent=5 // pred_check
        _
      $region30: #{tpu_custom_call.1} parent=5 // pred_check_branch
        %171 = sbr.rel (%p168) target = $region32
      $region31: #{tpu_custom_call.1} parent=5 // pred_region
        %s172 = ssub.s32 %s16, 1
        %s173 = sand.u32 %s29, 1
        %s174 = scalar_lea.sflag [#allocation3], %s173
        %s175 = sand.u32 %s29, 1
        %s176 = smul.addr %s175, 256
        %s177 = scalar_lea.vmem [#allocation2], %s176
        // Predicated region
        $region33: #{tpu_custom_call.1} parent=31 // pred_check
          %p178 = pneg %p42
        $region34: #{tpu_custom_call.1} parent=31 // pred_check_branch
          %180 = sbr.rel (%p178) target = $region36
        $region35: #{tpu_custom_call.1} parent=31 // pred_region
          %181 = dma.done %s174, 4096
        $region36: #{tpu_custom_call.1} parent=31 // pred_fallthru
          _
        // Predicated region
        $region37: #{tpu_custom_call.1} parent=31 // pred_check
          %p182 = pneg %p63
        $region38: #{tpu_custom_call.1} parent=31 // pred_check_branch
          %184 = sbr.rel (%p182) target = $region40
        $region39: #{tpu_custom_call.1} parent=31 // pred_region
          %185 = dma.done [#allocation6], 6144
        $region40: #{tpu_custom_call.1} parent=31 // pred_fallthru
          _
        %s186 = sand.u32 %s29, 1
        %s187 = scalar_lea.sflag [#allocation3], %s186
        %s188 = sand.u32 %s29, 1
        %s189 = smul.addr %s188, 256
        %s190 = scalar_lea.vmem [#allocation2], %s189
        %p191 = pneg %p42
        %p192 = pneg %p39
        %p193 = pneg %p63
        %p194 = pneg %p60
        %p195 = pneg %p84
        %p196 = pneg %p81
        %p197 = pneg %p110
        %p198 = pneg %p107
        %s199 = sand.u32 %s97, 1
        %s200 = scalar_lea.sflag [#allocation4], %s199
        %s201 = sand.u32 %s97, 1
        %s202 = smul.addr %s201, 768
        %s203 = scalar_lea.vmem [#allocation7], %s202
        %s204 = smul.u32 32, %s21
        %s205 = smul.u32 32, %s21
        %v206 = vld [vmem:[%s177] sm:$0xff]
        %v207 = vld [vmem:[%s177 + $0x8] sm:$0xff]
        %v208 = vld [vmem:[%s177 + $0x10] sm:$0xff]
        %v209 = vld [vmem:[%s177 + $0x18] sm:$0xff]
        %v210 = vld [vmem:[%s177 + $0x20] sm:$0xff]
        %v211 = vld [vmem:[%s177 + $0x28] sm:$0xff]
        %v212 = vld [vmem:[%s177 + $0x30] sm:$0xff]
        %v213 = vld [vmem:[%s177 + $0x38] sm:$0xff]
        %v214 = vld [vmem:[%s177 + $0x40] sm:$0xff]
        %v215 = vld [vmem:[%s177 + $0x48] sm:$0xff]
        %v216 = vld [vmem:[%s177 + $0x50] sm:$0xff]
        %v217 = vld [vmem:[%s177 + $0x58] sm:$0xff]
        %v218 = vld [vmem:[%s177 + $0x60] sm:$0xff]
        %v219 = vld [vmem:[%s177 + $0x68] sm:$0xff]
        %v220 = vld [vmem:[%s177 + $0x70] sm:$0xff]
        %v221 = vld [vmem:[%s177 + $0x78] sm:$0xff]
        %v222 = vld [vmem:[%s177 + $0x80] sm:$0xff]
        %v223 = vld [vmem:[%s177 + $0x88] sm:$0xff]
        %v224 = vld [vmem:[%s177 + $0x90] sm:$0xff]
        %v225 = vld [vmem:[%s177 + $0x98] sm:$0xff]
        %v226 = vld [vmem:[%s177 + $0xa0] sm:$0xff]
        %v227 = vld [vmem:[%s177 + $0xa8] sm:$0xff]
        %v228 = vld [vmem:[%s177 + $0xb0] sm:$0xff]
        %v229 = vld [vmem:[%s177 + $0xb8] sm:$0xff]
        %v230 = vld [vmem:[%s177 + $0xc0] sm:$0xff]
        %v231 = vld [vmem:[%s177 + $0xc8] sm:$0xff]
        %v232 = vld [vmem:[%s177 + $0xd0] sm:$0xff]
        %v233 = vld [vmem:[%s177 + $0xd8] sm:$0xff]
        %v234 = vld [vmem:[%s177 + $0xe0] sm:$0xff]
        %v235 = vld [vmem:[%s177 + $0xe8] sm:$0xff]
        %v236 = vld [vmem:[%s177 + $0xf0] sm:$0xff]
        %v237 = vld [vmem:[%s177 + $0xf8] sm:$0xff]
        %v238 = vld [vmem:[#allocation5] sm:$0xff]
        %v239 = vld [vmem:[#allocation5 + $0x8] sm:$0xff]
        %v240 = vld [vmem:[#allocation5 + $0x10] sm:$0xff]
        %v241 = vld [vmem:[#allocation5 + $0x18] sm:$0xff]
        %v242 = vld [vmem:[#allocation5 + $0x20] sm:$0xff]
        %v243 = vld [vmem:[#allocation5 + $0x28] sm:$0xff]
        %v244 = vld [vmem:[#allocation5 + $0x30] sm:$0xff]
        %v245 = vld [vmem:[#allocation5 + $0x38] sm:$0xff]
        %v246 = vld [vmem:[#allocation5 + $0x40] sm:$0xff]
        %v247 = vld [vmem:[#allocation5 + $0x48] sm:$0xff]
        %v248 = vld [vmem:[#allocation5 + $0x50] sm:$0xff]
        %v249 = vld [vmem:[#allocation5 + $0x58] sm:$0xff]
        %v250 = vld [vmem:[#allocation5 + $0x60] sm:$0xff]
        %v251 = vld [vmem:[#allocation5 + $0x68] sm:$0xff]
        %v252 = vld [vmem:[#allocation5 + $0x70] sm:$0xff]
        %v253 = vld [vmem:[#allocation5 + $0x78] sm:$0xff]
        %v254 = vld [vmem:[#allocation5 + $0x80] sm:$0xff]
        %v255 = vld [vmem:[#allocation5 + $0x88] sm:$0xff]
        %v256 = vld [vmem:[#allocation5 + $0x90] sm:$0xff]
        %v257 = vld [vmem:[#allocation5 + $0x98] sm:$0xff]
        %v258 = vld [vmem:[#allocation5 + $0xa0] sm:$0xff]
        %v259 = vld [vmem:[#allocation5 + $0xa8] sm:$0xff]
        %v260 = vld [vmem:[#allocation5 + $0xb0] sm:$0xff]
        %v261 = vld [vmem:[#allocation5 + $0xb8] sm:$0xff]
        %v262 = vld [vmem:[#allocation5 + $0xc0] sm:$0xff]
        %v263 = vld [vmem:[#allocation5 + $0xc8] sm:$0xff]
        %v264 = vld [vmem:[#allocation5 + $0xd0] sm:$0xff]
        %v265 = vld [vmem:[#allocation5 + $0xd8] sm:$0xff]
        %v266 = vld [vmem:[#allocation5 + $0xe0] sm:$0xff]
        %v267 = vld [vmem:[#allocation5 + $0xe8] sm:$0xff]
        %v268 = vld [vmem:[#allocation5 + $0xf0] sm:$0xff]
        %v269 = vld [vmem:[#allocation5 + $0xf8] sm:$0xff]
        %v270 = vld [vmem:[#allocation5 + $0x100] sm:$0xff]
        %v271 = vld [vmem:[#allocation5 + $0x108] sm:$0xff]
        %v272 = vld [vmem:[#allocation5 + $0x110] sm:$0xff]
        %v273 = vld [vmem:[#allocation5 + $0x118] sm:$0xff]
        %v274 = vld [vmem:[#allocation5 + $0x120] sm:$0xff]
        %v275 = vld [vmem:[#allocation5 + $0x128] sm:$0xff]
        %v276 = vld [vmem:[#allocation5 + $0x130] sm:$0xff]
        %v277 = vld [vmem:[#allocation5 + $0x138] sm:$0xff]
        %v278 = vld [vmem:[#allocation5 + $0x140] sm:$0xff]
        %v279 = vld [vmem:[#allocation5 + $0x148] sm:$0xff]
        %v280 = vld [vmem:[#allocation5 + $0x150] sm:$0xff]
        %v281 = vld [vmem:[#allocation5 + $0x158] sm:$0xff]
        %v282 = vld [vmem:[#allocation5 + $0x160] sm:$0xff]
        %v283 = vld [vmem:[#allocation5 + $0x168] sm:$0xff]
        %v284 = vld [vmem:[#allocation5 + $0x170] sm:$0xff]
        %v285 = vld [vmem:[#allocation5 + $0x178] sm:$0xff]
        %v286 = vld [vmem:[%s2] sm:$0x7]
        %v288 = vlaneseq
        %v289 = vshrl.u32 %v288, 7
        %v290 = vsub.s32 0, %v289
        %v291 = vrot.slane %v286, %v290
        %v292 = vlaneseq
        %v293 = vshrl.u32 %v292, 7
        %v294 = vsub.s32 1, %v293
        %v295 = vrot.slane %v286, %v294
        %v296 = vlaneseq
        %v297 = vshrl.u32 %v296, 7
        %v298 = vsub.s32 2, %v297
        %v299 = vrot.slane %v286, %v298
        %303 = vmatprep.subr.mxu0 %v239
        %304 = vmatpush1.msra.mxu0 %v238
        %305 = vmatprep.subr.mxu0 %v242
        %306 = vmatpush1.msra.mxu0 %v241
        %307 = vmatprep.subr.mxu0 %v245
        %308 = vmatpush1.msra.mxu0 %v244
        %309 = vmatprep.subr.mxu0 %v248
        %310 = vmatpush1.msra.mxu0 %v247
        %311 = vmatprep.subr.mxu0 %v251
        %312 = vmatpush1.msra.mxu0 %v250
        %313 = vmatprep.subr.mxu0 %v254
        %314 = vmatpush1.msra.mxu0 %v253
        %315 = vmatprep.subr.mxu0 %v257
        %316 = vmatpush1.msra.mxu0 %v256
        %317 = vmatprep.subr.mxu0 %v260
        %318 = vmatpush1.msra.mxu0 %v259
        %319 = vmatprep.subr.mxu0 %v263
        %320 = vmatpush1.msra.mxu0 %v262
        %321 = vmatprep.subr.mxu0 %v266
        %322 = vmatpush1.msra.mxu0 %v265
        %323 = vmatprep.subr.mxu0 %v269
        %324 = vmatpush1.msra.mxu0 %v268
        %325 = vmatprep.subr.mxu0 %v272
        %326 = vmatpush1.msra.mxu0 %v271
        %327 = vmatprep.subr.mxu0 %v275
        %328 = vmatpush1.msra.mxu0 %v274
        %329 = vmatprep.subr.mxu0 %v278
        %330 = vmatpush1.msra.mxu0 %v277
        %331 = vmatprep.subr.mxu0 %v281
        %332 = vmatpush1.msra.mxu0 %v280
        %333 = vmatprep.subr.mxu0 %v284
        %334 = vmatpush1.msra.mxu0 %v283
        %335 = vmatprep.subr.mxu0 0.0
        %336 = vmatpush1.msra.mxu0 0.0
        %337 = vmatprep.subr.mxu0 0.0
        %338 = vmatpush1.msra.mxu0 0.0
        %339 = vmatprep.subr.mxu0 0.0
        %340 = vmatpush1.msra.mxu0 0.0
        %341 = vmatprep.subr.mxu0 0.0
        %342 = vmatpush1.msra.mxu0 0.0
        %343 = vmatprep.subr.mxu0 0.0
        %344 = vmatpush1.msra.mxu0 0.0
        %345 = vmatprep.subr.mxu0 0.0
        %346 = vmatpush1.msra.mxu0 0.0
        %347 = vmatprep.subr.mxu0 0.0
        %348 = vmatpush1.msra.mxu0 0.0
        %349 = vmatprep.subr.mxu0 0.0
        %350 = vmatpush1.msra.mxu0 0.0
        %351 = vmatprep.subr.mxu0 0.0
        %352 = vmatpush1.msra.mxu0 0.0
        %353 = vmatprep.subr.mxu0 0.0
        %354 = vmatpush1.msra.mxu0 0.0
        %355 = vmatprep.subr.mxu0 0.0
        %356 = vmatpush1.msra.mxu0 0.0
        %357 = vmatprep.subr.mxu0 0.0
        %358 = vmatpush1.msra.mxu0 0.0
        %359 = vmatprep.subr.mxu0 0.0
        %360 = vmatpush1.msra.mxu0 0.0
        %361 = vmatprep.subr.mxu0 0.0
        %362 = vmatpush1.msra.mxu0 0.0
        %363 = vmatprep.subr.mxu0 0.0
        %364 = vmatpush1.msra.mxu0 0.0
        %365 = vmatprep.subr.mxu0 0.0
        %366 = vmatpush1.msra.mxu0 0.0
        %367 = vmatprep.mubr.f32.mxu0 0.0
        %368 = vmatmul.mubr.f32.gmra.mrb[0].mxu0 %v206
        %v369 = vpop.f32.mrb[0].mxu0
        %v370 = vadd.f32 %v291, %v369
        %v371 = vpop.f32.mrb[0].mxu0
        %v372 = vadd.f32 %v295, %v371
        %373 = vmatprep.mubr.f32.mxu0 0.0
        %374 = vmatmul.mubr.f32.gmra.mrb[0].mxu0 %v207
        %v375 = vpop.f32.mrb[0].mxu0
        %v376 = vadd.f32 %v291, %v375
        %v377 = vpop.f32.mrb[0].mxu0
        %v378 = vadd.f32 %v295, %v377
        %379 = vmatprep.mubr.f32.mxu0 0.0
        %380 = vmatmul.mubr.f32.gmra.mrb[0].mxu0 %v208
        %v381 = vpop.f32.mrb[0].mxu0
        %v382 = vadd.f32 %v291, %v381
        %v383 = vpop.f32.mrb[0].mxu0
        %v384 = vadd.f32 %v295, %v383
        %385 = vmatprep.mubr.f32.mxu0 0.0
        %386 = vmatmul.mubr.f32.gmra.mrb[0].mxu0 %v209
        %v387 = vpop.f32.mrb[0].mxu0
        %v388 = vadd.f32 %v291, %v387
        %v389 = vpop.f32.mrb[0].mxu0
        %v390 = vadd.f32 %v295, %v389
        %391 = vmatprep.mubr.f32.mxu0 0.0
        %392 = vmatmul.mubr.f32.gmra.mrb[0].mxu0 %v210
        %v393 = vpop.f32.mrb[0].mxu0
        %v394 = vadd.f32 %v291, %v393
        %v395 = vpop.f32.mrb[0].mxu0
        %v396 = vadd.f32 %v295, %v395
        %397 = vmatprep.mubr.f32.mxu0 0.0
        %398 = vmatmul.mubr.f32.gmra.mrb[0].mxu0 %v211
        %v399 = vpop.f32.mrb[0].mxu0
        %v400 = vadd.f32 %v291, %v399
        %v401 = vpop.f32.mrb[0].mxu0
        %v402 = vadd.f32 %v295, %v401
        %403 = vmatprep.mubr.f32.mxu0 0.0
        %404 = vmatmul.mubr.f32.gmra.mrb[0].mxu0 %v212
        %v405 = vpop.f32.mrb[0].mxu0
        %v406 = vadd.f32 %v291, %v405
        %v407 = vpop.f32.mrb[0].mxu0
        %v408 = vadd.f32 %v295, %v407
        %409 = vmatprep.mubr.f32.mxu0 0.0
        %410 = vmatmul.mubr.f32.gmra.mrb[0].mxu0 %v213
        %v411 = vpop.f32.mrb[0].mxu0
        %v412 = vadd.f32 %v291, %v411
        %v413 = vpop.f32.mrb[0].mxu0
        %v414 = vadd.f32 %v295, %v413
        %415 = vmatprep.mubr.f32.mxu0 0.0
        %416 = vmatmul.mubr.f32.gmra.mrb[0].mxu0 %v214
        %v417 = vpop.f32.mrb[0].mxu0
        %v418 = vadd.f32 %v291, %v417
        %v419 = vpop.f32.mrb[0].mxu0
        %v420 = vadd.f32 %v295, %v419
        %421 = vmatprep.mubr.f32.mxu0 0.0
        %422 = vmatmul.mubr.f32.gmra.mrb[0].mxu0 %v215
        %v423 = vpop.f32.mrb[0].mxu0
        %v424 = vadd.f32 %v291, %v423
        %v425 = vpop.f32.mrb[0].mxu0
        %v426 = vadd.f32 %v295, %v425
        %427 = vmatprep.mubr.f32.mxu0 0.0
        %428 = vmatmul.mubr.f32.gmra.mrb[0].mxu0 %v216
        %v429 = vpop.f32.mrb[0].mxu0
        %v430 = vadd.f32 %v291, %v429
        %v431 = vpop.f32.mrb[0].mxu0
        %v432 = vadd.f32 %v295, %v431
        %433 = vmatprep.mubr.f32.mxu0 0.0
        %434 = vmatmul.mubr.f32.gmra.mrb[0].mxu0 %v217
        %v435 = vpop.f32.mrb[0].mxu0
        %v436 = vadd.f32 %v291, %v435
        %v437 = vpop.f32.mrb[0].mxu0
        %v438 = vadd.f32 %v295, %v437
        %439 = vmatprep.mubr.f32.mxu0 0.0
        %440 = vmatmul.mubr.f32.gmra.mrb[0].mxu0 %v218
        %v441 = vpop.f32.mrb[0].mxu0
        %v442 = vadd.f32 %v291, %v441
        %v443 = vpop.f32.mrb[0].mxu0
        %v444 = vadd.f32 %v295, %v443
        %445 = vmatprep.mubr.f32.mxu0 0.0
        %446 = vmatmul.mubr.f32.gmra.mrb[0].mxu0 %v219
        %v447 = vpop.f32.mrb[0].mxu0
        %v448 = vadd.f32 %v291, %v447
        %v449 = vpop.f32.mrb[0].mxu0
        %v450 = vadd.f32 %v295, %v449
        %451 = vmatprep.mubr.f32.mxu0 0.0
        %452 = vmatmul.mubr.f32.gmra.mrb[0].mxu0 %v220
        %v453 = vpop.f32.mrb[0].mxu0
        %v454 = vadd.f32 %v291, %v453
        %v455 = vpop.f32.mrb[0].mxu0
        %v456 = vadd.f32 %v295, %v455
        %457 = vmatprep.mubr.f32.mxu0 0.0
        %458 = vmatmul.mubr.f32.gmra.mrb[0].mxu0 %v221
        %v459 = vpop.f32.mrb[0].mxu0
        %v460 = vadd.f32 %v291, %v459
        %v461 = vpop.f32.mrb[0].mxu0
        %v462 = vadd.f32 %v295, %v461
        %463 = vmatprep.mubr.f32.mxu0 0.0
        %464 = vmatmul.mubr.f32.gmra.mrb[0].mxu0 %v222
        %v465 = vpop.f32.mrb[0].mxu0
        %v466 = vadd.f32 %v291, %v465
        %v467 = vpop.f32.mrb[0].mxu0
        %v468 = vadd.f32 %v295, %v467
        %469 = vmatprep.mubr.f32.mxu0 0.0
        %470 = vmatmul.mubr.f32.gmra.mrb[0].mxu0 %v223
        %v471 = vpop.f32.mrb[0].mxu0
        %v472 = vadd.f32 %v291, %v471
        %v473 = vpop.f32.mrb[0].mxu0
        %v474 = vadd.f32 %v295, %v473
        %475 = vmatprep.mubr.f32.mxu0 0.0
        %476 = vmatmul.mubr.f32.gmra.mrb[0].mxu0 %v224
        %v477 = vpop.f32.mrb[0].mxu0
        %v478 = vadd.f32 %v291, %v477
        %v479 = vpop.f32.mrb[0].mxu0
        %v480 = vadd.f32 %v295, %v479
        %481 = vmatprep.mubr.f32.mxu0 0.0
        %482 = vmatmul.mubr.f32.gmra.mrb[0].mxu0 %v225
        %v483 = vpop.f32.mrb[0].mxu0
        %v484 = vadd.f32 %v291, %v483
        %v485 = vpop.f32.mrb[0].mxu0
        %v486 = vadd.f32 %v295, %v485
        %487 = vmatprep.mubr.f32.mxu0 0.0
        %488 = vmatmul.mubr.f32.gmra.mrb[0].mxu0 %v226
        %v489 = vpop.f32.mrb[0].mxu0
        %v490 = vadd.f32 %v291, %v489
        %v491 = vpop.f32.mrb[0].mxu0
        %v492 = vadd.f32 %v295, %v491
        %493 = vmatprep.mubr.f32.mxu0 0.0
        %494 = vmatmul.mubr.f32.gmra.mrb[0].mxu0 %v227
        %v495 = vpop.f32.mrb[0].mxu0
        %v496 = vadd.f32 %v291, %v495
        %v497 = vpop.f32.mrb[0].mxu0
        %v498 = vadd.f32 %v295, %v497
        %499 = vmatprep.mubr.f32.mxu0 0.0
        %500 = vmatmul.mubr.f32.gmra.mrb[0].mxu0 %v228
        %v501 = vpop.f32.mrb[0].mxu0
        %v502 = vadd.f32 %v291, %v501
        %v503 = vpop.f32.mrb[0].mxu0
        %v504 = vadd.f32 %v295, %v503
        %505 = vmatprep.mubr.f32.mxu0 0.0
        %506 = vmatmul.mubr.f32.gmra.mrb[0].mxu0 %v229
        %v507 = vpop.f32.mrb[0].mxu0
        %v508 = vadd.f32 %v291, %v507
        %v509 = vpop.f32.mrb[0].mxu0
        %v510 = vadd.f32 %v295, %v509
        %511 = vmatprep.mubr.f32.mxu0 0.0
        %512 = vmatmul.mubr.f32.gmra.mrb[0].mxu0 %v230
        %v513 = vpop.f32.mrb[0].mxu0
        %v514 = vadd.f32 %v291, %v513
        %v515 = vpop.f32.mrb[0].mxu0
        %v516 = vadd.f32 %v295, %v515
        %517 = vmatprep.mubr.f32.mxu0 0.0
        %518 = vmatmul.mubr.f32.gmra.mrb[0].mxu0 %v231
        %v519 = vpop.f32.mrb[0].mxu0
        %v520 = vadd.f32 %v291, %v519
        %v521 = vpop.f32.mrb[0].mxu0
        %v522 = vadd.f32 %v295, %v521
        %523 = vmatprep.mubr.f32.mxu0 0.0
        %524 = vmatmul.mubr.f32.gmra.mrb[0].mxu0 %v232
        %v525 = vpop.f32.mrb[0].mxu0
        %v526 = vadd.f32 %v291, %v525
        %v527 = vpop.f32.mrb[0].mxu0
        %v528 = vadd.f32 %v295, %v527
        %529 = vmatprep.mubr.f32.mxu0 0.0
        %530 = vmatmul.mubr.f32.gmra.mrb[0].mxu0 %v233
        %v531 = vpop.f32.mrb[0].mxu0
        %v532 = vadd.f32 %v291, %v531
        %v533 = vpop.f32.mrb[0].mxu0
        %v534 = vadd.f32 %v295, %v533
        %535 = vmatprep.mubr.f32.mxu0 0.0
        %536 = vmatmul.mubr.f32.gmra.mrb[0].mxu0 %v234
        %v537 = vpop.f32.mrb[0].mxu0
        %v538 = vadd.f32 %v291, %v537
        %v539 = vpop.f32.mrb[0].mxu0
        %v540 = vadd.f32 %v295, %v539
        %541 = vmatprep.mubr.f32.mxu0 0.0
        %542 = vmatmul.mubr.f32.gmra.mrb[0].mxu0 %v235
        %v543 = vpop.f32.mrb[0].mxu0
        %v544 = vadd.f32 %v291, %v543
        %v545 = vpop.f32.mrb[0].mxu0
        %v546 = vadd.f32 %v295, %v545
        %547 = vmatprep.mubr.f32.mxu0 0.0
        %548 = vmatmul.mubr.f32.gmra.mrb[0].mxu0 %v236
        %v549 = vpop.f32.mrb[0].mxu0
        %v550 = vadd.f32 %v291, %v549
        %v551 = vpop.f32.mrb[0].mxu0
        %v552 = vadd.f32 %v295, %v551
        %553 = vmatprep.mubr.f32.mxu0 0.0
        %554 = vmatmul.mubr.f32.gmra.mrb[0].mxu0 %v237
        %v555 = vpop.f32.mrb[0].mxu0
        %v556 = vadd.f32 %v291, %v555
        %v557 = vpop.f32.mrb[0].mxu0
        %v558 = vadd.f32 %v295, %v557
        %559 = vdwg.mxu0
        %560 = vmatprep.subr.mxu0 0.0
        %561 = vmatpush1.msra.mxu0 %v240
        %562 = vmatprep.subr.mxu0 0.0
        %563 = vmatpush1.msra.mxu0 %v243
        %564 = vmatprep.subr.mxu0 0.0
        %565 = vmatpush1.msra.mxu0 %v246
        %566 = vmatprep.subr.mxu0 0.0
        %567 = vmatpush1.msra.mxu0 %v249
        %568 = vmatprep.subr.mxu0 0.0
        %569 = vmatpush1.msra.mxu0 %v252
        %570 = vmatprep.subr.mxu0 0.0
        %571 = vmatpush1.msra.mxu0 %v255
        %572 = vmatprep.subr.mxu0 0.0
        %573 = vmatpush1.msra.mxu0 %v258
        %574 = vmatprep.subr.mxu0 0.0
        %575 = vmatpush1.msra.mxu0 %v261
        %576 = vmatprep.subr.mxu0 0.0
        %577 = vmatpush1.msra.mxu0 %v264
        %578 = vmatprep.subr.mxu0 0.0
        %579 = vmatpush1.msra.mxu0 %v267
        %580 = vmatprep.subr.mxu0 0.0
        %581 = vmatpush1.msra.mxu0 %v270
        %582 = vmatprep.subr.mxu0 0.0
        %583 = vmatpush1.msra.mxu0 %v273
        %584 = vmatprep.subr.mxu0 0.0
        %585 = vmatpush1.msra.mxu0 %v276
        %586 = vmatprep.subr.mxu0 0.0
        %587 = vmatpush1.msra.mxu0 %v279
        %588 = vmatprep.subr.mxu0 0.0
        %589 = vmatpush1.msra.mxu0 %v282
        %590 = vmatprep.subr.mxu0 0.0
        %591 = vmatpush1.msra.mxu0 %v285
        %592 = vmatprep.subr.mxu0 0.0
        %593 = vmatpush1.msra.mxu0 0.0
        %594 = vmatprep.subr.mxu0 0.0
        %595 = vmatpush1.msra.mxu0 0.0
        %596 = vmatprep.subr.mxu0 0.0
        %597 = vmatpush1.msra.mxu0 0.0
        %598 = vmatprep.subr.mxu0 0.0
        %599 = vmatpush1.msra.mxu0 0.0
        %600 = vmatprep.subr.mxu0 0.0
        %601 = vmatpush1.msra.mxu0 0.0
        %602 = vmatprep.subr.mxu0 0.0
        %603 = vmatpush1.msra.mxu0 0.0
        %604 = vmatprep.subr.mxu0 0.0
        %605 = vmatpush1.msra.mxu0 0.0
        %606 = vmatprep.subr.mxu0 0.0
        %607 = vmatpush1.msra.mxu0 0.0
        %608 = vmatprep.subr.mxu0 0.0
        %609 = vmatpush1.msra.mxu0 0.0
        %610 = vmatprep.subr.mxu0 0.0
        %611 = vmatpush1.msra.mxu0 0.0
        %612 = vmatprep.subr.mxu0 0.0
        %613 = vmatpush1.msra.mxu0 0.0
        %614 = vmatprep.subr.mxu0 0.0
        %615 = vmatpush1.msra.mxu0 0.0
        %616 = vmatprep.subr.mxu0 0.0
        %617 = vmatpush1.msra.mxu0 0.0
        %618 = vmatprep.subr.mxu0 0.0
        %619 = vmatpush1.msra.mxu0 0.0
        %620 = vmatprep.subr.mxu0 0.0
        %621 = vmatpush1.msra.mxu0 0.0
        %622 = vmatprep.subr.mxu0 0.0
        %623 = vmatpush1.msra.mxu0 0.0
        %624 = vmatprep.mubr.f32.mxu0 0.0
        %625 = vmatmul.mubr.f32.gmra.mrb[0].mxu0 %v206
        %v626 = vpop.f32.mrb[0].mxu0
        %v627 = vadd.f32 %v299, %v626
        %v628 = vpop.f32.mrb[0].mxu0
        %629 = vmatprep.mubr.f32.mxu0 0.0
        %630 = vmatmul.mubr.f32.gmra.mrb[0].mxu0 %v207
        %v631 = vpop.f32.mrb[0].mxu0
        %v632 = vadd.f32 %v299, %v631
        %v633 = vpop.f32.mrb[0].mxu0
        %634 = vmatprep.mubr.f32.mxu0 0.0
        %635 = vmatmul.mubr.f32.gmra.mrb[0].mxu0 %v208
        %v636 = vpop.f32.mrb[0].mxu0
        %v637 = vadd.f32 %v299, %v636
        %v638 = vpop.f32.mrb[0].mxu0
        %639 = vmatprep.mubr.f32.mxu0 0.0
        %640 = vmatmul.mubr.f32.gmra.mrb[0].mxu0 %v209
        %v641 = vpop.f32.mrb[0].mxu0
        %v642 = vadd.f32 %v299, %v641
        %v643 = vpop.f32.mrb[0].mxu0
        %644 = vmatprep.mubr.f32.mxu0 0.0
        %645 = vmatmul.mubr.f32.gmra.mrb[0].mxu0 %v210
        %v646 = vpop.f32.mrb[0].mxu0
        %v647 = vadd.f32 %v299, %v646
        %v648 = vpop.f32.mrb[0].mxu0
        %649 = vmatprep.mubr.f32.mxu0 0.0
        %650 = vmatmul.mubr.f32.gmra.mrb[0].mxu0 %v211
        %v651 = vpop.f32.mrb[0].mxu0
        %v652 = vadd.f32 %v299, %v651
        %v653 = vpop.f32.mrb[0].mxu0
        %654 = vmatprep.mubr.f32.mxu0 0.0
        %655 = vmatmul.mubr.f32.gmra.mrb[0].mxu0 %v212
        %v656 = vpop.f32.mrb[0].mxu0
        %v657 = vadd.f32 %v299, %v656
        %v658 = vpop.f32.mrb[0].mxu0
        %659 = vmatprep.mubr.f32.mxu0 0.0
        %660 = vmatmul.mubr.f32.gmra.mrb[0].mxu0 %v213
        %v661 = vpop.f32.mrb[0].mxu0
        %v662 = vadd.f32 %v299, %v661
        %v663 = vpop.f32.mrb[0].mxu0
        %664 = vmatprep.mubr.f32.mxu0 0.0
        %665 = vmatmul.mubr.f32.gmra.mrb[0].mxu0 %v214
        %v666 = vpop.f32.mrb[0].mxu0
        %v667 = vadd.f32 %v299, %v666
        %v668 = vpop.f32.mrb[0].mxu0
        %669 = vmatprep.mubr.f32.mxu0 0.0
        %670 = vmatmul.mubr.f32.gmra.mrb[0].mxu0 %v215
        %v671 = vpop.f32.mrb[0].mxu0
        %v672 = vadd.f32 %v299, %v671
        %v673 = vpop.f32.mrb[0].mxu0
        %674 = vmatprep.mubr.f32.mxu0 0.0
        %675 = vmatmul.mubr.f32.gmra.mrb[0].mxu0 %v216
        %v676 = vpop.f32.mrb[0].mxu0
        %v677 = vadd.f32 %v299, %v676
        %v678 = vpop.f32.mrb[0].mxu0
        %679 = vmatprep.mubr.f32.mxu0 0.0
        %680 = vmatmul.mubr.f32.gmra.mrb[0].mxu0 %v217
        %v681 = vpop.f32.mrb[0].mxu0
        %v682 = vadd.f32 %v299, %v681
        %v683 = vpop.f32.mrb[0].mxu0
        %684 = vmatprep.mubr.f32.mxu0 0.0
        %685 = vmatmul.mubr.f32.gmra.mrb[0].mxu0 %v218
        %v686 = vpop.f32.mrb[0].mxu0
        %v687 = vadd.f32 %v299, %v686
        %v688 = vpop.f32.mrb[0].mxu0
        %689 = vmatprep.mubr.f32.mxu0 0.0
        %690 = vmatmul.mubr.f32.gmra.mrb[0].mxu0 %v219
        %v691 = vpop.f32.mrb[0].mxu0
        %v692 = vadd.f32 %v299, %v691
        %v693 = vpop.f32.mrb[0].mxu0
        %694 = vmatprep.mubr.f32.mxu0 0.0
        %695 = vmatmul.mubr.f32.gmra.mrb[0].mxu0 %v220
        %v696 = vpop.f32.mrb[0].mxu0
        %v697 = vadd.f32 %v299, %v696
        %v698 = vpop.f32.mrb[0].mxu0
        %699 = vmatprep.mubr.f32.mxu0 0.0
        %700 = vmatmul.mubr.f32.gmra.mrb[0].mxu0 %v221
        %v701 = vpop.f32.mrb[0].mxu0
        %v702 = vadd.f32 %v299, %v701
        %v703 = vpop.f32.mrb[0].mxu0
        %704 = vmatprep.mubr.f32.mxu0 0.0
        %705 = vmatmul.mubr.f32.gmra.mrb[0].mxu0 %v222
        %v706 = vpop.f32.mrb[0].mxu0
        %v707 = vadd.f32 %v299, %v706
        %v708 = vpop.f32.mrb[0].mxu0
        %709 = vmatprep.mubr.f32.mxu0 0.0
        %710 = vmatmul.mubr.f32.gmra.mrb[0].mxu0 %v223
        %v711 = vpop.f32.mrb[0].mxu0
        %v712 = vadd.f32 %v299, %v711
        %v713 = vpop.f32.mrb[0].mxu0
        %714 = vmatprep.mubr.f32.mxu0 0.0
        %715 = vmatmul.mubr.f32.gmra.mrb[0].mxu0 %v224
        %v716 = vpop.f32.mrb[0].mxu0
        %v717 = vadd.f32 %v299, %v716
        %v718 = vpop.f32.mrb[0].mxu0
        %719 = vmatprep.mubr.f32.mxu0 0.0
        %720 = vmatmul.mubr.f32.gmra.mrb[0].mxu0 %v225
        %v721 = vpop.f32.mrb[0].mxu0
        %v722 = vadd.f32 %v299, %v721
        %v723 = vpop.f32.mrb[0].mxu0
        %724 = vmatprep.mubr.f32.mxu0 0.0
        %725 = vmatmul.mubr.f32.gmra.mrb[0].mxu0 %v226
        %v726 = vpop.f32.mrb[0].mxu0
        %v727 = vadd.f32 %v299, %v726
        %v728 = vpop.f32.mrb[0].mxu0
        %729 = vmatprep.mubr.f32.mxu0 0.0
        %730 = vmatmul.mubr.f32.gmra.mrb[0].mxu0 %v227
        %v731 = vpop.f32.mrb[0].mxu0
        %v732 = vadd.f32 %v299, %v731
        %v733 = vpop.f32.mrb[0].mxu0
        %734 = vmatprep.mubr.f32.mxu0 0.0
        %735 = vmatmul.mubr.f32.gmra.mrb[0].mxu0 %v228
        %v736 = vpop.f32.mrb[0].mxu0
        %v737 = vadd.f32 %v299, %v736
        %v738 = vpop.f32.mrb[0].mxu0
        %739 = vmatprep.mubr.f32.mxu0 0.0
        %740 = vmatmul.mubr.f32.gmra.mrb[0].mxu0 %v229
        %v741 = vpop.f32.mrb[0].mxu0
        %v742 = vadd.f32 %v299, %v741
        %v743 = vpop.f32.mrb[0].mxu0
        %744 = vmatprep.mubr.f32.mxu0 0.0
        %745 = vmatmul.mubr.f32.gmra.mrb[0].mxu0 %v230
        %v746 = vpop.f32.mrb[0].mxu0
        %v747 = vadd.f32 %v299, %v746
        %v748 = vpop.f32.mrb[0].mxu0
        %749 = vmatprep.mubr.f32.mxu0 0.0
        %750 = vmatmul.mubr.f32.gmra.mrb[0].mxu0 %v231
        %v751 = vpop.f32.mrb[0].mxu0
        %v752 = vadd.f32 %v299, %v751
        %v753 = vpop.f32.mrb[0].mxu0
        %754 = vmatprep.mubr.f32.mxu0 0.0
        %755 = vmatmul.mubr.f32.gmra.mrb[0].mxu0 %v232
        %v756 = vpop.f32.mrb[0].mxu0
        %v757 = vadd.f32 %v299, %v756
        %v758 = vpop.f32.mrb[0].mxu0
        %759 = vmatprep.mubr.f32.mxu0 0.0
        %760 = vmatmul.mubr.f32.gmra.mrb[0].mxu0 %v233
        %v761 = vpop.f32.mrb[0].mxu0
        %v762 = vadd.f32 %v299, %v761
        %v763 = vpop.f32.mrb[0].mxu0
        %764 = vmatprep.mubr.f32.mxu0 0.0
        %765 = vmatmul.mubr.f32.gmra.mrb[0].mxu0 %v234
        %v766 = vpop.f32.mrb[0].mxu0
        %v767 = vadd.f32 %v299, %v766
        %v768 = vpop.f32.mrb[0].mxu0
        %769 = vmatprep.mubr.f32.mxu0 0.0
        %770 = vmatmul.mubr.f32.gmra.mrb[0].mxu0 %v235
        %v771 = vpop.f32.mrb[0].mxu0
        %v772 = vadd.f32 %v299, %v771
        %v773 = vpop.f32.mrb[0].mxu0
        %774 = vmatprep.mubr.f32.mxu0 0.0
        %775 = vmatmul.mubr.f32.gmra.mrb[0].mxu0 %v236
        %v776 = vpop.f32.mrb[0].mxu0
        %v777 = vadd.f32 %v299, %v776
        %v778 = vpop.f32.mrb[0].mxu0
        %779 = vmatprep.mubr.f32.mxu0 0.0
        %780 = vmatmul.mubr.f32.gmra.mrb[0].mxu0 %v237
        %v781 = vpop.f32.mrb[0].mxu0
        %v782 = vadd.f32 %v299, %v781
        %v783 = vpop.f32.mrb[0].mxu0
        %784 = vdwg.mxu0
        %785 = vst [vmem:[%s203] sm:$0xff] %v370
        %786 = vst [vmem:[%s203 + $0x8] sm:$0xff] %v372
        %787 = vst [vmem:[%s203 + $0x10] sm:$0xff] %v627
        %788 = vst [vmem:[%s203 + $0x18] sm:$0xff] %v376
        %789 = vst [vmem:[%s203 + $0x20] sm:$0xff] %v378
        %790 = vst [vmem:[%s203 + $0x28] sm:$0xff] %v632
        %791 = vst [vmem:[%s203 + $0x30] sm:$0xff] %v382
        %792 = vst [vmem:[%s203 + $0x38] sm:$0xff] %v384
        %793 = vst [vmem:[%s203 + $0x40] sm:$0xff] %v637
        %794 = vst [vmem:[%s203 + $0x48] sm:$0xff] %v388
        %795 = vst [vmem:[%s203 + $0x50] sm:$0xff] %v390
        %796 = vst [vmem:[%s203 + $0x58] sm:$0xff] %v642
        %797 = vst [vmem:[%s203 + $0x60] sm:$0xff] %v394
        %798 = vst [vmem:[%s203 + $0x68] sm:$0xff] %v396
        %799 = vst [vmem:[%s203 + $0x70] sm:$0xff] %v647
        %800 = vst [vmem:[%s203 + $0x78] sm:$0xff] %v400
        %801 = vst [vmem:[%s203 + $0x80] sm:$0xff] %v402
        %802 = vst [vmem:[%s203 + $0x88] sm:$0xff] %v652
        %803 = vst [vmem:[%s203 + $0x90] sm:$0xff] %v406
        %804 = vst [vmem:[%s203 + $0x98] sm:$0xff] %v408
        %805 = vst [vmem:[%s203 + $0xa0] sm:$0xff] %v657
        %806 = vst [vmem:[%s203 + $0xa8] sm:$0xff] %v412
        %807 = vst [vmem:[%s203 + $0xb0] sm:$0xff] %v414
        %808 = vst [vmem:[%s203 + $0xb8] sm:$0xff] %v662
        %809 = vst [vmem:[%s203 + $0xc0] sm:$0xff] %v418
        %810 = vst [vmem:[%s203 + $0xc8] sm:$0xff] %v420
        %811 = vst [vmem:[%s203 + $0xd0] sm:$0xff] %v667
        %812 = vst [vmem:[%s203 + $0xd8] sm:$0xff] %v424
        %813 = vst [vmem:[%s203 + $0xe0] sm:$0xff] %v426
        %814 = vst [vmem:[%s203 + $0xe8] sm:$0xff] %v672
        %815 = vst [vmem:[%s203 + $0xf0] sm:$0xff] %v430
        %816 = vst [vmem:[%s203 + $0xf8] sm:$0xff] %v432
        %817 = vst [vmem:[%s203 + $0x100] sm:$0xff] %v677
        %818 = vst [vmem:[%s203 + $0x108] sm:$0xff] %v436
        %819 = vst [vmem:[%s203 + $0x110] sm:$0xff] %v438
        %820 = vst [vmem:[%s203 + $0x118] sm:$0xff] %v682
        %821 = vst [vmem:[%s203 + $0x120] sm:$0xff] %v442
        %822 = vst [vmem:[%s203 + $0x128] sm:$0xff] %v444
        %823 = vst [vmem:[%s203 + $0x130] sm:$0xff] %v687
        %824 = vst [vmem:[%s203 + $0x138] sm:$0xff] %v448
        %825 = vst [vmem:[%s203 + $0x140] sm:$0xff] %v450
        %826 = vst [vmem:[%s203 + $0x148] sm:$0xff] %v692
        %827 = vst [vmem:[%s203 + $0x150] sm:$0xff] %v454
        %828 = vst [vmem:[%s203 + $0x158] sm:$0xff] %v456
        %829 = vst [vmem:[%s203 + $0x160] sm:$0xff] %v697
        %830 = vst [vmem:[%s203 + $0x168] sm:$0xff] %v460
        %831 = vst [vmem:[%s203 + $0x170] sm:$0xff] %v462
        %832 = vst [vmem:[%s203 + $0x178] sm:$0xff] %v702
        %833 = vst [vmem:[%s203 + $0x180] sm:$0xff] %v466
        %834 = vst [vmem:[%s203 + $0x188] sm:$0xff] %v468
        %835 = vst [vmem:[%s203 + $0x190] sm:$0xff] %v707
        %836 = vst [vmem:[%s203 + $0x198] sm:$0xff] %v472
        %837 = vst [vmem:[%s203 + $0x1a0] sm:$0xff] %v474
        %838 = vst [vmem:[%s203 + $0x1a8] sm:$0xff] %v712
        %839 = vst [vmem:[%s203 + $0x1b0] sm:$0xff] %v478
        %840 = vst [vmem:[%s203 + $0x1b8] sm:$0xff] %v480
        %841 = vst [vmem:[%s203 + $0x1c0] sm:$0xff] %v717
        %842 = vst [vmem:[%s203 + $0x1c8] sm:$0xff] %v484
        %843 = vst [vmem:[%s203 + $0x1d0] sm:$0xff] %v486
        %844 = vst [vmem:[%s203 + $0x1d8] sm:$0xff] %v722
        %845 = vst [vmem:[%s203 + $0x1e0] sm:$0xff] %v490
        %846 = vst [vmem:[%s203 + $0x1e8] sm:$0xff] %v492
        %847 = vst [vmem:[%s203 + $0x1f0] sm:$0xff] %v727
        %848 = vst [vmem:[%s203 + $0x1f8] sm:$0xff] %v496
        %849 = vst [vmem:[%s203 + $0x200] sm:$0xff] %v498
        %850 = vst [vmem:[%s203 + $0x208] sm:$0xff] %v732
        %851 = vst [vmem:[%s203 + $0x210] sm:$0xff] %v502
        %852 = vst [vmem:[%s203 + $0x218] sm:$0xff] %v504
        %853 = vst [vmem:[%s203 + $0x220] sm:$0xff] %v737
        %854 = vst [vmem:[%s203 + $0x228] sm:$0xff] %v508
        %855 = vst [vmem:[%s203 + $0x230] sm:$0xff] %v510
        %856 = vst [vmem:[%s203 + $0x238] sm:$0xff] %v742
        %857 = vst [vmem:[%s203 + $0x240] sm:$0xff] %v514
        %858 = vst [vmem:[%s203 + $0x248] sm:$0xff] %v516
        %859 = vst [vmem:[%s203 + $0x250] sm:$0xff] %v747
        %860 = vst [vmem:[%s203 + $0x258] sm:$0xff] %v520
        %861 = vst [vmem:[%s203 + $0x260] sm:$0xff] %v522
        %862 = vst [vmem:[%s203 + $0x268] sm:$0xff] %v752
        %863 = vst [vmem:[%s203 + $0x270] sm:$0xff] %v526
        %864 = vst [vmem:[%s203 + $0x278] sm:$0xff] %v528
        %865 = vst [vmem:[%s203 + $0x280] sm:$0xff] %v757
        %866 = vst [vmem:[%s203 + $0x288] sm:$0xff] %v532
        %867 = vst [vmem:[%s203 + $0x290] sm:$0xff] %v534
        %868 = vst [vmem:[%s203 + $0x298] sm:$0xff] %v762
        %869 = vst [vmem:[%s203 + $0x2a0] sm:$0xff] %v538
        %870 = vst [vmem:[%s203 + $0x2a8] sm:$0xff] %v540
        %871 = vst [vmem:[%s203 + $0x2b0] sm:$0xff] %v767
        %872 = vst [vmem:[%s203 + $0x2b8] sm:$0xff] %v544
        %873 = vst [vmem:[%s203 + $0x2c0] sm:$0xff] %v546
        %874 = vst [vmem:[%s203 + $0x2c8] sm:$0xff] %v772
        %875 = vst [vmem:[%s203 + $0x2d0] sm:$0xff] %v550
        %876 = vst [vmem:[%s203 + $0x2d8] sm:$0xff] %v552
        %877 = vst [vmem:[%s203 + $0x2e0] sm:$0xff] %v777
        %878 = vst [vmem:[%s203 + $0x2e8] sm:$0xff] %v556
        %879 = vst [vmem:[%s203 + $0x2f0] sm:$0xff] %v558
        %880 = vst [vmem:[%s203 + $0x2f8] sm:$0xff] %v782
        %s881 = sand.u32 %s97, 1
        %s882 = scalar_lea.sflag [#allocation4], %s881
        %s883 = sand.u32 %s97, 1
        %s884 = smul.addr %s883, 768
        %s885 = scalar_lea.vmem [#allocation7], %s884
        // Predicated region
        $region41: #{tpu_custom_call.1} parent=31 // pred_check
          %p886 = pneg %p107
        $region42: #{tpu_custom_call.1} parent=31 // pred_check_branch
          %888 = sbr.rel (%p886) target = $region44
        $region43: #{tpu_custom_call.1} parent=31 // pred_region
          %s889 = smul.u32 32, %s21
          %s891 = ssub.s32 12288, 12288
          %892 = vsyncadd %s882, %s891
          %s893 = smul.addr %s889, 3
          %s894 = smul.addr %s893, 128
          %s895 = scalar_lea.hbm %s3, %s894
          %s896 = sshll.u32 %s885, 4
          %s897 = int_to_ptr.vmem [resolvable:$true] %s896
          %902 = dma.vmem_to_hbm [thread:$0]  %s897, 12288, %s895, %s882, 384, 384, 24
        $region44: #{tpu_custom_call.1} parent=31 // pred_fallthru
          _
      $region32: #{tpu_custom_call.1} parent=5 // pred_fallthru
        _
      %p903 = scmp.le.s32.totalorder 2, %s16
      // Predicated region
      $region45: #{tpu_custom_call.1} parent=5 // pred_check
        %p904 = pneg %p903
      $region46: #{tpu_custom_call.1} parent=5 // pred_check_branch
        %906 = sbr.rel (%p904) target = $region48
      $region47: #{tpu_custom_call.1} parent=5 // pred_region
        %s907 = ssub.s32 %s16, 2
        // Predicated region
        $region49: #{tpu_custom_call.1} parent=47 // pred_check
          %p908 = pneg %p113
        $region50: #{tpu_custom_call.1} parent=47 // pred_check_branch
          %910 = sbr.rel (%p908) target = $region52
        $region51: #{tpu_custom_call.1} parent=47 // pred_region
          %s911 = sand.u32 %s98, 1
          %s912 = scalar_lea.sflag [#allocation4], %s911
          %s913 = sand.u32 %s98, 1
          %s914 = smul.addr %s913, 768
          %s915 = scalar_lea.vmem [#allocation7], %s914
          %916 = dma.done %s912, 12288
        $region52: #{tpu_custom_call.1} parent=47 // pred_fallthru
          _
      $region48: #{tpu_custom_call.1} parent=5 // pred_fallthru
        _
    $region6: #{tpu_custom_call.1} parent=1 // loop_footer
      %s20 = sadd.s32 1, %s16
    $region7: #{tpu_custom_call.1} parent=1 // loop_footer_branch
      %15 = sbr.rel target = $region3
    $region8: #{tpu_custom_call.1} parent=1 // loop_exit
      _
    %917 = vsyncpa [#allocation3], 1
    %s918 = scalar_lea.sflag [#allocation3], 1
    %919 = vsyncpa %s918, 1
    %920 = vsyncpa [#allocation6], 1
    %921 = vsyncpa [#allocation4], 1
    %s922 = scalar_lea.sflag [#allocation4], 1
    %923 = vsyncpa %s922, 1

// kernel: tpu_custom_call.1
$region0: #{tpu_custom_call.1}
  #allocation0 [shape = 'u32[]', space=smem, size = 0x4, offset = 0x4, fixed_abs, tag = 'smem constant byte address 0x4 - core index']
  #allocation1 [shape = 'u32[144,128]{1,0:T(1,128)}', space=vmem, size = 0x12000, scoped, tag = 'internal scratch']
  %s0 = inlined_call_operand.hbm [shape: f32[512,128], index: 0, kind: input, shape index: {}]
  %s1 = inlined_call_operand.hbm [shape: f32[128,384], index: 1, kind: input, shape index: {}]
  %s2 = inlined_call_operand.vmem [shape: f32[1,384], index: 2, kind: input, shape index: {}]
  %s3 = inlined_call_operand.hbm [shape: f32[512,384], index: 3, kind: output, shape index: {}]
  %s4 = sld [smem:[#allocation0]]
  $region53: #{tpu_custom_call.1} parent=0
    _
  %s6 = ssub.s32 1, %s4
  %s7 = scalar_select 0, %s6, %s4
  $region1: #{tpu_custom_call.1} parent=0
    #allocation2 [shape = 'u8[262144]{0}', space=vmem, size = 0x40000, scoped, tag = 'input window, operand 0']
    #allocation3 [shape = 's32[2]{0}', space=sflag, size = 0x8, scoped, tag = 'scoped memory for tpu_custom_call.1']
    #allocation4 [shape = 's32[2]{0}', space=sflag, size = 0x8, scoped, tag = 'scoped memory for tpu_custom_call.1']
    #allocation5 [shape = 'u8[196608]{0}', space=vmem, size = 0x30000, scoped, tag = 'input window, operand 1, single buffered']
    #allocation6 [shape = 's32[1]{0}', space=sflag, size = 0x4, scoped, tag = 'scoped memory for tpu_custom_call.1']
    #allocation7 [shape = 'u8[786432]{0}', space=vmem, size = 0xc0000, scoped, tag = 'output window, operand 0']
    %8 = vsyncpa [#allocation3], 0
    %s9 = scalar_lea.sflag [#allocation3], 1
    %10 = vsyncpa %s9, 0
    %11 = vsyncpa [#allocation6], 0
    %12 = vsyncpa [#allocation4], 0
    %s13 = scalar_lea.sflag [#allocation4], 1
    %14 = vsyncpa %s13, 0
    loop: start=0, step=1, limit=4
    $region2: #{tpu_custom_call.1} parent=1 // loop_pre_header
      _
    $region3: #{tpu_custom_call.1} parent=1 // loop_header
      %s16 = sphi 0, %s20
      %p17 = scmp.ge.s32.totalorder %s16, 4
      %s26 = sphi 0, %s28
      %s29 = sphi 0, %s26
      %s30 = sphi 0, %s29
      %s46 = sphi 0, %s30
      %s50 = sphi 0, %s50
      %s52 = sphi 0, %s50
      %s53 = sphi 0, %s52
      %s67 = sphi 0, %s53
      %s71 = sphi 0, %s71
      %s73 = sphi 0, %s71
      %s74 = sphi 0, %s73
      %s88 = sphi 0, %s74
      %s94 = sphi 0, %s96
      %s97 = sphi 0, %s94
      %s98 = sphi 0, %s97
      %s114 = sphi 0, %s98
    $region4: #{tpu_custom_call.1} parent=1 // loop_header_branch
      %19 = sbr.rel (%p17) target = $region8
    $region5: #{tpu_custom_call.1} parent=1 // loop_body
      %s21 = ssub.s32 %s16, 1
      %s22 = ssub.s32 %s16, 2
      %s23 = sadd.s32 %s16, 1
      %s24 = ssub.s32 %s16, %s23
      %p25 = scmp.eq.s32.totalorder %s24, 0
      %s27 = sadd.s32 %s26, 1
      %s28 = scalar_select %p25, %s26, %s27
      %p31 = pneg %p25
      %p32 = scmp.eq.s32.totalorder %s16, 1
      %p33 = por %p31, %p32
      %p34 = scmp.ne.s32.totalorder %s26, %s29
      %p35 = scmp.eq.s32.totalorder %s16, 0
      %p36 = por %p34, %p35
      %p37 = scmp.ne.s32.totalorder %s26, %s29
      %p38 = scmp.eq.s32.totalorder %s21, 1
      %p39 = por %p37, %p38
      %p40 = scmp.ne.s32.totalorder %s29, %s30
      %p41 = scmp.eq.s32.totalorder %s21, 0
      %p42 = por %p40, %p41
      %p43 = scmp.ne.s32.totalorder %s29, %s30
      %p44 = scmp.eq.s32.totalorder %s22, 1
      %p45 = por %p43, %p44
      %p47 = scmp.ne.s32.totalorder %s30, %s46
      %p48 = scmp.eq.s32.totalorder %s22, 0
      %p49 = por %p47, %p48
      %s51 = sadd.s32 %s50, 1
      %p54 = scmp.eq.s32.totalorder %s16, 1
      %p55 = scmp.ne.s32.totalorder %s50, %s52
      %p56 = scmp.eq.s32.totalorder %s16, 0
      %p57 = por %p55, %p56
      %p58 = scmp.ne.s32.totalorder %s50, %s52
      %p59 = scmp.eq.s32.totalorder %s21, 1
      %p60 = por %p58, %p59
      %p61 = scmp.ne.s32.totalorder %s52, %s53
      %p62 = scmp.eq.s32.totalorder %s21, 0
      %p63 = por %p61, %p62
      %p64 = scmp.ne.s32.totalorder %s52, %s53
      %p65 = scmp.eq.s32.totalorder %s22, 1
      %p66 = por %p64, %p65
      %p68 = scmp.ne.s32.totalorder %s53, %s67
      %p69 = scmp.eq.s32.totalorder %s22, 0
      %p70 = por %p68, %p69
      %s72 = sadd.s32 %s71, 1
      %p75 = scmp.eq.s32.totalorder %s16, 1
      %p76 = scmp.ne.s32.totalorder %s71, %s73
      %p77 = scmp.eq.s32.totalorder %s16, 0
      %p78 = por %p76, %p77
      %p79 = scmp.ne.s32.totalorder %s71, %s73
      %p80 = scmp.eq.s32.totalorder %s21, 1
      %p81 = por %p79, %p80
      %p82 = scmp.ne.s32.totalorder %s73, %s74
      %p83 = scmp.eq.s32.totalorder %s21, 0
      %p84 = por %p82, %p83
      %p85 = scmp.ne.s32.totalorder %s73, %s74
      %p86 = scmp.eq.s32.totalorder %s22, 1
      %p87 = por %p85, %p86
      %p89 = scmp.ne.s32.totalorder %s74, %s88
      %p90 = scmp.eq.s32.totalorder %s22, 0
      %p91 = por %p89, %p90
      %s92 = ssub.s32 %s16, %s23
      %p93 = scmp.eq.s32.totalorder %s92, 0
      %s95 = sadd.s32 %s94, 1
      %s96 = scalar_select %p93, %s94, %s95
      %p99 = pneg %p93
      %p100 = scmp.eq.s32.totalorder %s16, 1
      %p101 = por %p99, %p100
      %p102 = scmp.ne.s32.totalorder %s94, %s97
      %p103 = scmp.eq.s32.totalorder %s16, 0
      %p104 = por %p102, %p103
      %p105 = scmp.ne.s32.totalorder %s94, %s97
      %p106 = scmp.eq.s32.totalorder %s21, 1
      %p107 = por %p105, %p106
      %p108 = scmp.ne.s32.totalorder %s97, %s98
      %p109 = scmp.eq.s32.totalorder %s21, 0
      %p110 = por %p108, %p109
      %p111 = scmp.ne.s32.totalorder %s97, %s98
      %p112 = scmp.eq.s32.totalorder %s22, 1
      %p113 = por %p111, %p112
      %p115 = scmp.ne.s32.totalorder %s98, %s114
      %p116 = scmp.eq.s32.totalorder %s22, 0
      %p117 = por %p115, %p116
      %p118 = scmp.le.s32.totalorder 1, %s16
      %p119 = scmp.lt.s32.totalorder %s16, 3
      %p120 = pnand %p118, %p119
      %p121 = pneg %p120
      // Predicated region
      $region9: #{tpu_custom_call.1} parent=5 // pred_check
        _
      $region10: #{tpu_custom_call.1} parent=5 // pred_check_branch
        %123 = sbr.rel (%p120) target = $region12
      $region11: #{tpu_custom_call.1} parent=5 // pred_region
        %s124 = ssub.s32 %s16, 1
        // Predicated region
        $region13: #{tpu_custom_call.1} parent=11 // pred_check
          %p125 = pneg %p63
        $region14: #{tpu_custom_call.1} parent=11 // pred_check_branch
          %127 = sbr.rel (%p125) target = $region16
        $region15: #{tpu_custom_call.1} parent=11 // pred_region
          %s129 = ssub.s32 6144, 6144
          %130 = vsyncadd [#allocation6], %s129
          %s131 = sshll.u32 [#allocation5], 4
          %s132 = int_to_ptr.vmem [resolvable:$true] %s131
          %137 = dma.hbm_to_vmem [thread:$0]  %s1, 6144, %s132, [#allocation6], 384, 384, 24
        $region16: #{tpu_custom_call.1} parent=11 // pred_fallthru
          _
        // Predicated region
        $region17: #{tpu_custom_call.1} parent=11 // pred_check
          %p138 = pneg %p84
        $region18: #{tpu_custom_call.1} parent=11 // pred_check_branch
          %140 = sbr.rel (%p138) target = $region20
        $region19: #{tpu_custom_call.1} parent=11 // pred_region
          _
        $region20: #{tpu_custom_call.1} parent=11 // pred_fallthru
          _
      $region12: #{tpu_custom_call.1} parent=5 // pred_fallthru
        _
      %p141 = scmp.lt.s32.totalorder %s16, 2
      // Predicated region
      $region21: #{tpu_custom_call.1} parent=5 // pred_check
        %p142 = pneg %p141
      $region22: #{tpu_custom_call.1} parent=5 // pred_check_branch
        %144 = sbr.rel (%p142) target = $region24
      $region23: #{tpu_custom_call.1} parent=5 // pred_region
        // Predicated region
        $region25: #{tpu_custom_call.1} parent=23 // pred_check
          %p145 = pneg %p36
        $region26: #{tpu_custom_call.1} parent=23 // pred_check_branch
          %147 = sbr.rel (%p145) target = $region28
        $region27: #{tpu_custom_call.1} parent=23 // pred_region
          %s148 = sand.u32 %s26, 1
          %s149 = scalar_lea.sflag [#allocation3], %s148
          %s150 = sand.u32 %s26, 1
          %s151 = smul.addr %s150, 256
          %s152 = scalar_lea.vmem [#allocation2], %s151
          %s153 = smul.u32 32, %s16
          %s155 = ssub.s32 4096, 4096
          %156 = vsyncadd %s149, %s155
          %s157 = smul.addr %s153, 128
          %s158 = scalar_lea.hbm %s0, %s157
          %s159 = sshll.u32 %s152, 4
          %s160 = int_to_ptr.vmem [resolvable:$true] %s159
          %165 = dma.hbm_to_vmem [thread:$0]  %s158, 4096, %s160, %s149, 128, 128, 8
        $region28: #{tpu_custom_call.1} parent=23 // pred_fallthru
          _
      $region24: #{tpu_custom_call.1} parent=5 // pred_fallthru
        _
      %p166 = scmp.le.s32.totalorder 1, %s16
      %p167 = scmp.lt.s32.totalorder %s16, 3
      %p168 = pnand %p166, %p167
      %p169 = pneg %p168
      // Predicated region
      $region29: #{tpu_custom_call.1} parent=5 // pred_check
        _
      $region30: #{tpu_custom_call.1} parent=5 // pred_check_branch
        %171 = sbr.rel (%p168) target = $region32
      $region31: #{tpu_custom_call.1} parent=5 // pred_region
        %s172 = ssub.s32 %s16, 1
        %s173 = sand.u32 %s29, 1
        %s174 = scalar_lea.sflag [#allocation3], %s173
        %s175 = sand.u32 %s29, 1
        %s176 = smul.addr %s175, 256
        %s177 = scalar_lea.vmem [#allocation2], %s176
        // Predicated region
        $region33: #{tpu_custom_call.1} parent=31 // pred_check
          %p178 = pneg %p42
        $region34: #{tpu_custom_call.1} parent=31 // pred_check_branch
          %180 = sbr.rel (%p178) target = $region36
        $region35: #{tpu_custom_call.1} parent=31 // pred_region
          %181 = dma.done %s174, 4096
        $region36: #{tpu_custom_call.1} parent=31 // pred_fallthru
          _
        // Predicated region
        $region37: #{tpu_custom_call.1} parent=31 // pred_check
          %p182 = pneg %p63
        $region38: #{tpu_custom_call.1} parent=31 // pred_check_branch
          %184 = sbr.rel (%p182) target = $region40
        $region39: #{tpu_custom_call.1} parent=31 // pred_region
          %185 = dma.done [#allocation6], 6144
        $region40: #{tpu_custom_call.1} parent=31 // pred_fallthru
          _
        %s186 = sand.u32 %s29, 1
        %s187 = scalar_lea.sflag [#allocation3], %s186
        %s188 = sand.u32 %s29, 1
        %s189 = smul.addr %s188, 256
        %s190 = scalar_lea.vmem [#allocation2], %s189
        %p191 = pneg %p42
        %p192 = pneg %p39
        %p193 = pneg %p63
        %p194 = pneg %p60
        %p195 = pneg %p84
        %p196 = pneg %p81
        %p197 = pneg %p110
        %p198 = pneg %p107
        %s199 = sand.u32 %s97, 1
        %s200 = scalar_lea.sflag [#allocation4], %s199
        %s201 = sand.u32 %s97, 1
        %s202 = smul.addr %s201, 768
        %s203 = scalar_lea.vmem [#allocation7], %s202
        %s204 = smul.u32 32, %s21
        %s205 = smul.u32 32, %s21
        %v206 = vld [vmem:[%s177] sm:$0xff]
        %v207 = vld [vmem:[%s177 + $0x8] sm:$0xff]
        %v208 = vld [vmem:[%s177 + $0x10] sm:$0xff]
        %v209 = vld [vmem:[%s177 + $0x18] sm:$0xff]
        %v210 = vld [vmem:[%s177 + $0x20] sm:$0xff]
        %v211 = vld [vmem:[%s177 + $0x28] sm:$0xff]
        %v212 = vld [vmem:[%s177 + $0x30] sm:$0xff]
        %v213 = vld [vmem:[%s177 + $0x38] sm:$0xff]
        %v214 = vld [vmem:[%s177 + $0x40] sm:$0xff]
        %v215 = vld [vmem:[%s177 + $0x48] sm:$0xff]
        %v216 = vld [vmem:[%s177 + $0x50] sm:$0xff]
        %v217 = vld [vmem:[%s177 + $0x58] sm:$0xff]
        %v218 = vld [vmem:[%s177 + $0x60] sm:$0xff]
        %v219 = vld [vmem:[%s177 + $0x68] sm:$0xff]
        %v220 = vld [vmem:[%s177 + $0x70] sm:$0xff]
        %v221 = vld [vmem:[%s177 + $0x78] sm:$0xff]
        %v222 = vld [vmem:[%s177 + $0x80] sm:$0xff]
        %v223 = vld [vmem:[%s177 + $0x88] sm:$0xff]
        %v224 = vld [vmem:[%s177 + $0x90] sm:$0xff]
        %v225 = vld [vmem:[%s177 + $0x98] sm:$0xff]
        %v226 = vld [vmem:[%s177 + $0xa0] sm:$0xff]
        %v227 = vld [vmem:[%s177 + $0xa8] sm:$0xff]
        %v228 = vld [vmem:[%s177 + $0xb0] sm:$0xff]
        %v229 = vld [vmem:[%s177 + $0xb8] sm:$0xff]
        %v230 = vld [vmem:[%s177 + $0xc0] sm:$0xff]
        %v231 = vld [vmem:[%s177 + $0xc8] sm:$0xff]
        %v232 = vld [vmem:[%s177 + $0xd0] sm:$0xff]
        %v233 = vld [vmem:[%s177 + $0xd8] sm:$0xff]
        %v234 = vld [vmem:[%s177 + $0xe0] sm:$0xff]
        %v235 = vld [vmem:[%s177 + $0xe8] sm:$0xff]
        %v236 = vld [vmem:[%s177 + $0xf0] sm:$0xff]
        %v237 = vld [vmem:[%s177 + $0xf8] sm:$0xff]
        %v238 = vld [vmem:[#allocation5] sm:$0xff]
        %v239 = vld [vmem:[#allocation5 + $0x8] sm:$0xff]
        %v240 = vld [vmem:[#allocation5 + $0x10] sm:$0xff]
        %v241 = vld [vmem:[#allocation5 + $0x18] sm:$0xff]
        %v242 = vld [vmem:[#allocation5 + $0x20] sm:$0xff]
        %v243 = vld [vmem:[#allocation5 + $0x28] sm:$0xff]
        %v244 = vld [vmem:[#allocation5 + $0x30] sm:$0xff]
        %v245 = vld [vmem:[#allocation5 + $0x38] sm:$0xff]
        %v246 = vld [vmem:[#allocation5 + $0x40] sm:$0xff]
        %v247 = vld [vmem:[#allocation5 + $0x48] sm:$0xff]
        %v248 = vld [vmem:[#allocation5 + $0x50] sm:$0xff]
        %v249 = vld [vmem:[#allocation5 + $0x58] sm:$0xff]
        %v250 = vld [vmem:[#allocation5 + $0x60] sm:$0xff]
        %v251 = vld [vmem:[#allocation5 + $0x68] sm:$0xff]
        %v252 = vld [vmem:[#allocation5 + $0x70] sm:$0xff]
        %v253 = vld [vmem:[#allocation5 + $0x78] sm:$0xff]
        %v254 = vld [vmem:[#allocation5 + $0x80] sm:$0xff]
        %v255 = vld [vmem:[#allocation5 + $0x88] sm:$0xff]
        %v256 = vld [vmem:[#allocation5 + $0x90] sm:$0xff]
        %v257 = vld [vmem:[#allocation5 + $0x98] sm:$0xff]
        %v258 = vld [vmem:[#allocation5 + $0xa0] sm:$0xff]
        %v259 = vld [vmem:[#allocation5 + $0xa8] sm:$0xff]
        %v260 = vld [vmem:[#allocation5 + $0xb0] sm:$0xff]
        %v261 = vld [vmem:[#allocation5 + $0xb8] sm:$0xff]
        %v262 = vld [vmem:[#allocation5 + $0xc0] sm:$0xff]
        %v263 = vld [vmem:[#allocation5 + $0xc8] sm:$0xff]
        %v264 = vld [vmem:[#allocation5 + $0xd0] sm:$0xff]
        %v265 = vld [vmem:[#allocation5 + $0xd8] sm:$0xff]
        %v266 = vld [vmem:[#allocation5 + $0xe0] sm:$0xff]
        %v267 = vld [vmem:[#allocation5 + $0xe8] sm:$0xff]
        %v268 = vld [vmem:[#allocation5 + $0xf0] sm:$0xff]
        %v269 = vld [vmem:[#allocation5 + $0xf8] sm:$0xff]
        %v270 = vld [vmem:[#allocation5 + $0x100] sm:$0xff]
        %v271 = vld [vmem:[#allocation5 + $0x108] sm:$0xff]
        %v272 = vld [vmem:[#allocation5 + $0x110] sm:$0xff]
        %v273 = vld [vmem:[#allocation5 + $0x118] sm:$0xff]
        %v274 = vld [vmem:[#allocation5 + $0x120] sm:$0xff]
        %v275 = vld [vmem:[#allocation5 + $0x128] sm:$0xff]
        %v276 = vld [vmem:[#allocation5 + $0x130] sm:$0xff]
        %v277 = vld [vmem:[#allocation5 + $0x138] sm:$0xff]
        %v278 = vld [vmem:[#allocation5 + $0x140] sm:$0xff]
        %v279 = vld [vmem:[#allocation5 + $0x148] sm:$0xff]
        %v280 = vld [vmem:[#allocation5 + $0x150] sm:$0xff]
        %v281 = vld [vmem:[#allocation5 + $0x158] sm:$0xff]
        %v282 = vld [vmem:[#allocation5 + $0x160] sm:$0xff]
        %v283 = vld [vmem:[#allocation5 + $0x168] sm:$0xff]
        %v284 = vld [vmem:[#allocation5 + $0x170] sm:$0xff]
        %v285 = vld [vmem:[#allocation5 + $0x178] sm:$0xff]
        %v286 = vld [vmem:[%s2] sm:$0x7]
        %v288 = vlaneseq
        %v289 = vshrl.u32 %v288, 7
        %v290 = vsub.s32 0, %v289
        %v291 = vrot.slane %v286, %v290
        %v292 = vlaneseq
        %v293 = vshrl.u32 %v292, 7
        %v294 = vsub.s32 1, %v293
        %v295 = vrot.slane %v286, %v294
        %v296 = vlaneseq
        %v297 = vshrl.u32 %v296, 7
        %v298 = vsub.s32 2, %v297
        %v299 = vrot.slane %v286, %v298
        %303 = vmatprep.subr.mxu0 %v239
        %304 = vmatpush1.msra.mxu0 %v238
        %305 = vmatprep.subr.mxu0 %v242
        %306 = vmatpush1.msra.mxu0 %v241
        %307 = vmatprep.subr.mxu0 %v245
        %308 = vmatpush1.msra.mxu0 %v244
        %309 = vmatprep.subr.mxu0 %v248
        %310 = vmatpush1.msra.mxu0 %v247
        %311 = vmatprep.subr.mxu0 %v251
        %312 = vmatpush1.msra.mxu0 %v250
        %313 = vmatprep.subr.mxu0 %v254
        %314 = vmatpush1.msra.mxu0 %v253
        %315 = vmatprep.subr.mxu0 %v257
        %316 = vmatpush1.msra.mxu0 %v256
        %317 = vmatprep.subr.mxu0 %v260
        %318 = vmatpush1.msra.mxu0 %v259
        %319 = vmatprep.subr.mxu0 %v263
        %320 = vmatpush1.msra.mxu0 %v262
        %321 = vmatprep.subr.mxu0 %v266
        %322 = vmatpush1.msra.mxu0 %v265
        %323 = vmatprep.subr.mxu0 %v269
        %324 = vmatpush1.msra.mxu0 %v268
        %325 = vmatprep.subr.mxu0 %v272
        %326 = vmatpush1.msra.mxu0 %v271
        %327 = vmatprep.subr.mxu0 %v275
        %328 = vmatpush1.msra.mxu0 %v274
        %329 = vmatprep.subr.mxu0 %v278
        %330 = vmatpush1.msra.mxu0 %v277
        %331 = vmatprep.subr.mxu0 %v281
        %332 = vmatpush1.msra.mxu0 %v280
        %333 = vmatprep.subr.mxu0 %v284
        %334 = vmatpush1.msra.mxu0 %v283
        %335 = vmatprep.subr.mxu0 0.0
        %336 = vmatpush1.msra.mxu0 0.0
        %337 = vmatprep.subr.mxu0 0.0
        %338 = vmatpush1.msra.mxu0 0.0
        %339 = vmatprep.subr.mxu0 0.0
        %340 = vmatpush1.msra.mxu0 0.0
        %341 = vmatprep.subr.mxu0 0.0
        %342 = vmatpush1.msra.mxu0 0.0
        %343 = vmatprep.subr.mxu0 0.0
        %344 = vmatpush1.msra.mxu0 0.0
        %345 = vmatprep.subr.mxu0 0.0
        %346 = vmatpush1.msra.mxu0 0.0
        %347 = vmatprep.subr.mxu0 0.0
        %348 = vmatpush1.msra.mxu0 0.0
        %349 = vmatprep.subr.mxu0 0.0
        %350 = vmatpush1.msra.mxu0 0.0
        %351 = vmatprep.subr.mxu0 0.0
        %352 = vmatpush1.msra.mxu0 0.0
        %353 = vmatprep.subr.mxu0 0.0
        %354 = vmatpush1.msra.mxu0 0.0
        %355 = vmatprep.subr.mxu0 0.0
        %356 = vmatpush1.msra.mxu0 0.0
        %357 = vmatprep.subr.mxu0 0.0
        %358 = vmatpush1.msra.mxu0 0.0
        %359 = vmatprep.subr.mxu0 0.0
        %360 = vmatpush1.msra.mxu0 0.0
        %361 = vmatprep.subr.mxu0 0.0
        %362 = vmatpush1.msra.mxu0 0.0
        %363 = vmatprep.subr.mxu0 0.0
        %364 = vmatpush1.msra.mxu0 0.0
        %365 = vmatprep.subr.mxu0 0.0
        %366 = vmatpush1.msra.mxu0 0.0
        %367 = vmatprep.mubr.f32.mxu0 0.0
        %368 = vmatmul.mubr.f32.gmra.mrb[0].mxu0 %v206
        %v369 = vpop.f32.mrb[0].mxu0
        %v370 = vadd.f32 %v291, %v369
        %v371 = vpop.f32.mrb[0].mxu0
        %v372 = vadd.f32 %v295, %v371
        %373 = vmatprep.mubr.f32.mxu0 0.0
        %374 = vmatmul.mubr.f32.gmra.mrb[0].mxu0 %v207
        %v375 = vpop.f32.mrb[0].mxu0
        %v376 = vadd.f32 %v291, %v375
        %v377 = vpop.f32.mrb[0].mxu0
        %v378 = vadd.f32 %v295, %v377
        %379 = vmatprep.mubr.f32.mxu0 0.0
        %380 = vmatmul.mubr.f32.gmra.mrb[0].mxu0 %v208
        %v381 = vpop.f32.mrb[0].mxu0
        %v382 = vadd.f32 %v291, %v381
        %v383 = vpop.f32.mrb[0].mxu0
        %v384 = vadd.f32 %v295, %v383
        %385 = vmatprep.mubr.f32.mxu0 0.0
        %386 = vmatmul.mubr.f32.gmra.mrb[0].mxu0 %v209
        %v387 = vpop.f32.mrb[0].mxu0
        %v388 = vadd.f32 %v291, %v387
        %v389 = vpop.f32.mrb[0].mxu0
        %v390 = vadd.f32 %v295, %v389
        %391 = vmatprep.mubr.f32.mxu0 0.0
        %392 = vmatmul.mubr.f32.gmra.mrb[0].mxu0 %v210
        %v393 = vpop.f32.mrb[0].mxu0
        %v394 = vadd.f32 %v291, %v393
        %v395 = vpop.f32.mrb[0].mxu0
        %v396 = vadd.f32 %v295, %v395
        %397 = vmatprep.mubr.f32.mxu0 0.0
        %398 = vmatmul.mubr.f32.gmra.mrb[0].mxu0 %v211
        %v399 = vpop.f32.mrb[0].mxu0
        %v400 = vadd.f32 %v291, %v399
        %v401 = vpop.f32.mrb[0].mxu0
        %v402 = vadd.f32 %v295, %v401
        %403 = vmatprep.mubr.f32.mxu0 0.0
        %404 = vmatmul.mubr.f32.gmra.mrb[0].mxu0 %v212
        %v405 = vpop.f32.mrb[0].mxu0
        %v406 = vadd.f32 %v291, %v405
        %v407 = vpop.f32.mrb[0].mxu0
        %v408 = vadd.f32 %v295, %v407
        %409 = vmatprep.mubr.f32.mxu0 0.0
        %410 = vmatmul.mubr.f32.gmra.mrb[0].mxu0 %v213
        %v411 = vpop.f32.mrb[0].mxu0
        %v412 = vadd.f32 %v291, %v411
        %v413 = vpop.f32.mrb[0].mxu0
        %v414 = vadd.f32 %v295, %v413
        %415 = vmatprep.mubr.f32.mxu0 0.0
        %416 = vmatmul.mubr.f32.gmra.mrb[0].mxu0 %v214
        %v417 = vpop.f32.mrb[0].mxu0
        %v418 = vadd.f32 %v291, %v417
        %v419 = vpop.f32.mrb[0].mxu0
        %v420 = vadd.f32 %v295, %v419
        %421 = vmatprep.mubr.f32.mxu0 0.0
        %422 = vmatmul.mubr.f32.gmra.mrb[0].mxu0 %v215
        %v423 = vpop.f32.mrb[0].mxu0
        %v424 = vadd.f32 %v291, %v423
        %v425 = vpop.f32.mrb[0].mxu0
        %v426 = vadd.f32 %v295, %v425
        %427 = vmatprep.mubr.f32.mxu0 0.0
        %428 = vmatmul.mubr.f32.gmra.mrb[0].mxu0 %v216
        %v429 = vpop.f32.mrb[0].mxu0
        %v430 = vadd.f32 %v291, %v429
        %v431 = vpop.f32.mrb[0].mxu0
        %v432 = vadd.f32 %v295, %v431
        %433 = vmatprep.mubr.f32.mxu0 0.0
        %434 = vmatmul.mubr.f32.gmra.mrb[0].mxu0 %v217
        %v435 = vpop.f32.mrb[0].mxu0
        %v436 = vadd.f32 %v291, %v435
        %v437 = vpop.f32.mrb[0].mxu0
        %v438 = vadd.f32 %v295, %v437
        %439 = vmatprep.mubr.f32.mxu0 0.0
        %440 = vmatmul.mubr.f32.gmra.mrb[0].mxu0 %v218
        %v441 = vpop.f32.mrb[0].mxu0
        %v442 = vadd.f32 %v291, %v441
        %v443 = vpop.f32.mrb[0].mxu0
        %v444 = vadd.f32 %v295, %v443
        %445 = vmatprep.mubr.f32.mxu0 0.0
        %446 = vmatmul.mubr.f32.gmra.mrb[0].mxu0 %v219
        %v447 = vpop.f32.mrb[0].mxu0
        %v448 = vadd.f32 %v291, %v447
        %v449 = vpop.f32.mrb[0].mxu0
        %v450 = vadd.f32 %v295, %v449
        %451 = vmatprep.mubr.f32.mxu0 0.0
        %452 = vmatmul.mubr.f32.gmra.mrb[0].mxu0 %v220
        %v453 = vpop.f32.mrb[0].mxu0
        %v454 = vadd.f32 %v291, %v453
        %v455 = vpop.f32.mrb[0].mxu0
        %v456 = vadd.f32 %v295, %v455
        %457 = vmatprep.mubr.f32.mxu0 0.0
        %458 = vmatmul.mubr.f32.gmra.mrb[0].mxu0 %v221
        %v459 = vpop.f32.mrb[0].mxu0
        %v460 = vadd.f32 %v291, %v459
        %v461 = vpop.f32.mrb[0].mxu0
        %v462 = vadd.f32 %v295, %v461
        %463 = vmatprep.mubr.f32.mxu0 0.0
        %464 = vmatmul.mubr.f32.gmra.mrb[0].mxu0 %v222
        %v465 = vpop.f32.mrb[0].mxu0
        %v466 = vadd.f32 %v291, %v465
        %v467 = vpop.f32.mrb[0].mxu0
        %v468 = vadd.f32 %v295, %v467
        %469 = vmatprep.mubr.f32.mxu0 0.0
        %470 = vmatmul.mubr.f32.gmra.mrb[0].mxu0 %v223
        %v471 = vpop.f32.mrb[0].mxu0
        %v472 = vadd.f32 %v291, %v471
        %v473 = vpop.f32.mrb[0].mxu0
        %v474 = vadd.f32 %v295, %v473
        %475 = vmatprep.mubr.f32.mxu0 0.0
        %476 = vmatmul.mubr.f32.gmra.mrb[0].mxu0 %v224
        %v477 = vpop.f32.mrb[0].mxu0
        %v478 = vadd.f32 %v291, %v477
        %v479 = vpop.f32.mrb[0].mxu0
        %v480 = vadd.f32 %v295, %v479
        %481 = vmatprep.mubr.f32.mxu0 0.0
        %482 = vmatmul.mubr.f32.gmra.mrb[0].mxu0 %v225
        %v483 = vpop.f32.mrb[0].mxu0
        %v484 = vadd.f32 %v291, %v483
        %v485 = vpop.f32.mrb[0].mxu0
        %v486 = vadd.f32 %v295, %v485
        %487 = vmatprep.mubr.f32.mxu0 0.0
        %488 = vmatmul.mubr.f32.gmra.mrb[0].mxu0 %v226
        %v489 = vpop.f32.mrb[0].mxu0
        %v490 = vadd.f32 %v291, %v489
        %v491 = vpop.f32.mrb[0].mxu0
        %v492 = vadd.f32 %v295, %v491
        %493 = vmatprep.mubr.f32.mxu0 0.0
        %494 = vmatmul.mubr.f32.gmra.mrb[0].mxu0 %v227
        %v495 = vpop.f32.mrb[0].mxu0
        %v496 = vadd.f32 %v291, %v495
        %v497 = vpop.f32.mrb[0].mxu0
        %v498 = vadd.f32 %v295, %v497
        %499 = vmatprep.mubr.f32.mxu0 0.0
        %500 = vmatmul.mubr.f32.gmra.mrb[0].mxu0 %v228
        %v501 = vpop.f32.mrb[0].mxu0
        %v502 = vadd.f32 %v291, %v501
        %v503 = vpop.f32.mrb[0].mxu0
        %v504 = vadd.f32 %v295, %v503
        %505 = vmatprep.mubr.f32.mxu0 0.0
        %506 = vmatmul.mubr.f32.gmra.mrb[0].mxu0 %v229
        %v507 = vpop.f32.mrb[0].mxu0
        %v508 = vadd.f32 %v291, %v507
        %v509 = vpop.f32.mrb[0].mxu0
        %v510 = vadd.f32 %v295, %v509
        %511 = vmatprep.mubr.f32.mxu0 0.0
        %512 = vmatmul.mubr.f32.gmra.mrb[0].mxu0 %v230
        %v513 = vpop.f32.mrb[0].mxu0
        %v514 = vadd.f32 %v291, %v513
        %v515 = vpop.f32.mrb[0].mxu0
        %v516 = vadd.f32 %v295, %v515
        %517 = vmatprep.mubr.f32.mxu0 0.0
        %518 = vmatmul.mubr.f32.gmra.mrb[0].mxu0 %v231
        %v519 = vpop.f32.mrb[0].mxu0
        %v520 = vadd.f32 %v291, %v519
        %v521 = vpop.f32.mrb[0].mxu0
        %v522 = vadd.f32 %v295, %v521
        %523 = vmatprep.mubr.f32.mxu0 0.0
        %524 = vmatmul.mubr.f32.gmra.mrb[0].mxu0 %v232
        %v525 = vpop.f32.mrb[0].mxu0
        %v526 = vadd.f32 %v291, %v525
        %v527 = vpop.f32.mrb[0].mxu0
        %v528 = vadd.f32 %v295, %v527
        %529 = vmatprep.mubr.f32.mxu0 0.0
        %530 = vmatmul.mubr.f32.gmra.mrb[0].mxu0 %v233
        %v531 = vpop.f32.mrb[0].mxu0
        %v532 = vadd.f32 %v291, %v531
        %v533 = vpop.f32.mrb[0].mxu0
        %v534 = vadd.f32 %v295, %v533
        %535 = vmatprep.mubr.f32.mxu0 0.0
        %536 = vmatmul.mubr.f32.gmra.mrb[0].mxu0 %v234
        %v537 = vpop.f32.mrb[0].mxu0
        %v538 = vadd.f32 %v291, %v537
        %v539 = vpop.f32.mrb[0].mxu0
        %v540 = vadd.f32 %v295, %v539
        %541 = vmatprep.mubr.f32.mxu0 0.0
        %542 = vmatmul.mubr.f32.gmra.mrb[0].mxu0 %v235
        %v543 = vpop.f32.mrb[0].mxu0
        %v544 = vadd.f32 %v291, %v543
        %v545 = vpop.f32.mrb[0].mxu0
        %v546 = vadd.f32 %v295, %v545
        %547 = vmatprep.mubr.f32.mxu0 0.0
        %548 = vmatmul.mubr.f32.gmra.mrb[0].mxu0 %v236
        %v549 = vpop.f32.mrb[0].mxu0
        %v550 = vadd.f32 %v291, %v549
        %v551 = vpop.f32.mrb[0].mxu0
        %v552 = vadd.f32 %v295, %v551
        %553 = vmatprep.mubr.f32.mxu0 0.0
        %554 = vmatmul.mubr.f32.gmra.mrb[0].mxu0 %v237
        %v555 = vpop.f32.mrb[0].mxu0
        %v556 = vadd.f32 %v291, %v555
        %v557 = vpop.f32.mrb[0].mxu0
        %v558 = vadd.f32 %v295, %v557
        %559 = vdwg.mxu0
        %560 = vmatprep.subr.mxu0 0.0
        %561 = vmatpush1.msra.mxu0 %v240
        %562 = vmatprep.subr.mxu0 0.0
        %563 = vmatpush1.msra.mxu0 %v243
        %564 = vmatprep.subr.mxu0 0.0
        %565 = vmatpush1.msra.mxu0 %v246
        %566 = vmatprep.subr.mxu0 0.0
        %567 = vmatpush1.msra.mxu0 %v249
        %568 = vmatprep.subr.mxu0 0.0
        %569 = vmatpush1.msra.mxu0 %v252
        %570 = vmatprep.subr.mxu0 0.0
        %571 = vmatpush1.msra.mxu0 %v255
        %572 = vmatprep.subr.mxu0 0.0
        %573 = vmatpush1.msra.mxu0 %v258
        %574 = vmatprep.subr.mxu0 0.0
        %575 = vmatpush1.msra.mxu0 %v261
        %576 = vmatprep.subr.mxu0 0.0
        %577 = vmatpush1.msra.mxu0 %v264
        %578 = vmatprep.subr.mxu0 0.0
        %579 = vmatpush1.msra.mxu0 %v267
        %580 = vmatprep.subr.mxu0 0.0
        %581 = vmatpush1.msra.mxu0 %v270
        %582 = vmatprep.subr.mxu0 0.0
        %583 = vmatpush1.msra.mxu0 %v273
        %584 = vmatprep.subr.mxu0 0.0
        %585 = vmatpush1.msra.mxu0 %v276
        %586 = vmatprep.subr.mxu0 0.0
        %587 = vmatpush1.msra.mxu0 %v279
        %588 = vmatprep.subr.mxu0 0.0
        %589 = vmatpush1.msra.mxu0 %v282
        %590 = vmatprep.subr.mxu0 0.0
        %591 = vmatpush1.msra.mxu0 %v285
        %592 = vmatprep.subr.mxu0 0.0
        %593 = vmatpush1.msra.mxu0 0.0
        %594 = vmatprep.subr.mxu0 0.0
        %595 = vmatpush1.msra.mxu0 0.0
        %596 = vmatprep.subr.mxu0 0.0
        %597 = vmatpush1.msra.mxu0 0.0
        %598 = vmatprep.subr.mxu0 0.0
        %599 = vmatpush1.msra.mxu0 0.0
        %600 = vmatprep.subr.mxu0 0.0
        %601 = vmatpush1.msra.mxu0 0.0
        %602 = vmatprep.subr.mxu0 0.0
        %603 = vmatpush1.msra.mxu0 0.0
        %604 = vmatprep.subr.mxu0 0.0
        %605 = vmatpush1.msra.mxu0 0.0
        %606 = vmatprep.subr.mxu0 0.0
        %607 = vmatpush1.msra.mxu0 0.0
        %608 = vmatprep.subr.mxu0 0.0
        %609 = vmatpush1.msra.mxu0 0.0
        %610 = vmatprep.subr.mxu0 0.0
        %611 = vmatpush1.msra.mxu0 0.0
        %612 = vmatprep.subr.mxu0 0.0
        %613 = vmatpush1.msra.mxu0 0.0
        %614 = vmatprep.subr.mxu0 0.0
        %615 = vmatpush1.msra.mxu0 0.0
        %616 = vmatprep.subr.mxu0 0.0
        %617 = vmatpush1.msra.mxu0 0.0
        %618 = vmatprep.subr.mxu0 0.0
        %619 = vmatpush1.msra.mxu0 0.0
        %620 = vmatprep.subr.mxu0 0.0
        %621 = vmatpush1.msra.mxu0 0.0
        %622 = vmatprep.subr.mxu0 0.0
        %623 = vmatpush1.msra.mxu0 0.0
        %624 = vmatprep.mubr.f32.mxu0 0.0
        %625 = vmatmul.mubr.f32.gmra.mrb[0].mxu0 %v206
        %v626 = vpop.f32.mrb[0].mxu0
        %v627 = vadd.f32 %v299, %v626
        %v628 = vpop.f32.mrb[0].mxu0
        %629 = vmatprep.mubr.f32.mxu0 0.0
        %630 = vmatmul.mubr.f32.gmra.mrb[0].mxu0 %v207
        %v631 = vpop.f32.mrb[0].mxu0
        %v632 = vadd.f32 %v299, %v631
        %v633 = vpop.f32.mrb[0].mxu0
        %634 = vmatprep.mubr.f32.mxu0 0.0
        %635 = vmatmul.mubr.f32.gmra.mrb[0].mxu0 %v208
        %v636 = vpop.f32.mrb[0].mxu0
        %v637 = vadd.f32 %v299, %v636
        %v638 = vpop.f32.mrb[0].mxu0
        %639 = vmatprep.mubr.f32.mxu0 0.0
        %640 = vmatmul.mubr.f32.gmra.mrb[0].mxu0 %v209
        %v641 = vpop.f32.mrb[0].mxu0
        %v642 = vadd.f32 %v299, %v641
        %v643 = vpop.f32.mrb[0].mxu0
        %644 = vmatprep.mubr.f32.mxu0 0.0
        %645 = vmatmul.mubr.f32.gmra.mrb[0].mxu0 %v210
        %v646 = vpop.f32.mrb[0].mxu0
        %v647 = vadd.f32 %v299, %v646
        %v648 = vpop.f32.mrb[0].mxu0
        %649 = vmatprep.mubr.f32.mxu0 0.0
        %650 = vmatmul.mubr.f32.gmra.mrb[0].mxu0 %v211
        %v651 = vpop.f32.mrb[0].mxu0
        %v652 = vadd.f32 %v299, %v651
        %v653 = vpop.f32.mrb[0].mxu0
        %654 = vmatprep.mubr.f32.mxu0 0.0
        %655 = vmatmul.mubr.f32.gmra.mrb[0].mxu0 %v212
        %v656 = vpop.f32.mrb[0].mxu0
        %v657 = vadd.f32 %v299, %v656
        %v658 = vpop.f32.mrb[0].mxu0
        %659 = vmatprep.mubr.f32.mxu0 0.0
        %660 = vmatmul.mubr.f32.gmra.mrb[0].mxu0 %v213
        %v661 = vpop.f32.mrb[0].mxu0
        %v662 = vadd.f32 %v299, %v661
        %v663 = vpop.f32.mrb[0].mxu0
        %664 = vmatprep.mubr.f32.mxu0 0.0
        %665 = vmatmul.mubr.f32.gmra.mrb[0].mxu0 %v214
        %v666 = vpop.f32.mrb[0].mxu0
        %v667 = vadd.f32 %v299, %v666
        %v668 = vpop.f32.mrb[0].mxu0
        %669 = vmatprep.mubr.f32.mxu0 0.0
        %670 = vmatmul.mubr.f32.gmra.mrb[0].mxu0 %v215
        %v671 = vpop.f32.mrb[0].mxu0
        %v672 = vadd.f32 %v299, %v671
        %v673 = vpop.f32.mrb[0].mxu0
        %674 = vmatprep.mubr.f32.mxu0 0.0
        %675 = vmatmul.mubr.f32.gmra.mrb[0].mxu0 %v216
        %v676 = vpop.f32.mrb[0].mxu0
        %v677 = vadd.f32 %v299, %v676
        %v678 = vpop.f32.mrb[0].mxu0
        %679 = vmatprep.mubr.f32.mxu0 0.0
        %680 = vmatmul.mubr.f32.gmra.mrb[0].mxu0 %v217
        %v681 = vpop.f32.mrb[0].mxu0
        %v682 = vadd.f32 %v299, %v681
        %v683 = vpop.f32.mrb[0].mxu0
        %684 = vmatprep.mubr.f32.mxu0 0.0
        %685 = vmatmul.mubr.f32.gmra.mrb[0].mxu0 %v218
        %v686 = vpop.f32.mrb[0].mxu0
        %v687 = vadd.f32 %v299, %v686
        %v688 = vpop.f32.mrb[0].mxu0
        %689 = vmatprep.mubr.f32.mxu0 0.0
        %690 = vmatmul.mubr.f32.gmra.mrb[0].mxu0 %v219
        %v691 = vpop.f32.mrb[0].mxu0
        %v692 = vadd.f32 %v299, %v691
        %v693 = vpop.f32.mrb[0].mxu0
        %694 = vmatprep.mubr.f32.mxu0 0.0
        %695 = vmatmul.mubr.f32.gmra.mrb[0].mxu0 %v220
        %v696 = vpop.f32.mrb[0].mxu0
        %v697 = vadd.f32 %v299, %v696
        %v698 = vpop.f32.mrb[0].mxu0
        %699 = vmatprep.mubr.f32.mxu0 0.0
        %700 = vmatmul.mubr.f32.gmra.mrb[0].mxu0 %v221
        %v701 = vpop.f32.mrb[0].mxu0
        %v702 = vadd.f32 %v299, %v701
        %v703 = vpop.f32.mrb[0].mxu0
        %704 = vmatprep.mubr.f32.mxu0 0.0
        %705 = vmatmul.mubr.f32.gmra.mrb[0].mxu0 %v222
        %v706 = vpop.f32.mrb[0].mxu0
        %v707 = vadd.f32 %v299, %v706
        %v708 = vpop.f32.mrb[0].mxu0
        %709 = vmatprep.mubr.f32.mxu0 0.0
        %710 = vmatmul.mubr.f32.gmra.mrb[0].mxu0 %v223
        %v711 = vpop.f32.mrb[0].mxu0
        %v712 = vadd.f32 %v299, %v711
        %v713 = vpop.f32.mrb[0].mxu0
        %714 = vmatprep.mubr.f32.mxu0 0.0
        %715 = vmatmul.mubr.f32.gmra.mrb[0].mxu0 %v224
        %v716 = vpop.f32.mrb[0].mxu0
        %v717 = vadd.f32 %v299, %v716
        %v718 = vpop.f32.mrb[0].mxu0
        %719 = vmatprep.mubr.f32.mxu0 0.0
        %720 = vmatmul.mubr.f32.gmra.mrb[0].mxu0 %v225
        %v721 = vpop.f32.mrb[0].mxu0
        %v722 = vadd.f32 %v299, %v721
        %v723 = vpop.f32.mrb[0].mxu0
        %724 = vmatprep.mubr.f32.mxu0 0.0
        %725 = vmatmul.mubr.f32.gmra.mrb[0].mxu0 %v226
        %v726 = vpop.f32.mrb[0].mxu0
        %v727 = vadd.f32 %v299, %v726
        %v728 = vpop.f32.mrb[0].mxu0
        %729 = vmatprep.mubr.f32.mxu0 0.0
        %730 = vmatmul.mubr.f32.gmra.mrb[0].mxu0 %v227
        %v731 = vpop.f32.mrb[0].mxu0
        %v732 = vadd.f32 %v299, %v731
        %v733 = vpop.f32.mrb[0].mxu0
        %734 = vmatprep.mubr.f32.mxu0 0.0
        %735 = vmatmul.mubr.f32.gmra.mrb[0].mxu0 %v228
        %v736 = vpop.f32.mrb[0].mxu0
        %v737 = vadd.f32 %v299, %v736
        %v738 = vpop.f32.mrb[0].mxu0
        %739 = vmatprep.mubr.f32.mxu0 0.0
        %740 = vmatmul.mubr.f32.gmra.mrb[0].mxu0 %v229
        %v741 = vpop.f32.mrb[0].mxu0
        %v742 = vadd.f32 %v299, %v741
        %v743 = vpop.f32.mrb[0].mxu0
        %744 = vmatprep.mubr.f32.mxu0 0.0
        %745 = vmatmul.mubr.f32.gmra.mrb[0].mxu0 %v230
        %v746 = vpop.f32.mrb[0].mxu0
        %v747 = vadd.f32 %v299, %v746
        %v748 = vpop.f32.mrb[0].mxu0
        %749 = vmatprep.mubr.f32.mxu0 0.0
        %750 = vmatmul.mubr.f32.gmra.mrb[0].mxu0 %v231
        %v751 = vpop.f32.mrb[0].mxu0
        %v752 = vadd.f32 %v299, %v751
        %v753 = vpop.f32.mrb[0].mxu0
        %754 = vmatprep.mubr.f32.mxu0 0.0
        %755 = vmatmul.mubr.f32.gmra.mrb[0].mxu0 %v232
        %v756 = vpop.f32.mrb[0].mxu0
        %v757 = vadd.f32 %v299, %v756
        %v758 = vpop.f32.mrb[0].mxu0
        %759 = vmatprep.mubr.f32.mxu0 0.0
        %760 = vmatmul.mubr.f32.gmra.mrb[0].mxu0 %v233
        %v761 = vpop.f32.mrb[0].mxu0
        %v762 = vadd.f32 %v299, %v761
        %v763 = vpop.f32.mrb[0].mxu0
        %764 = vmatprep.mubr.f32.mxu0 0.0
        %765 = vmatmul.mubr.f32.gmra.mrb[0].mxu0 %v234
        %v766 = vpop.f32.mrb[0].mxu0
        %v767 = vadd.f32 %v299, %v766
        %v768 = vpop.f32.mrb[0].mxu0
        %769 = vmatprep.mubr.f32.mxu0 0.0
        %770 = vmatmul.mubr.f32.gmra.mrb[0].mxu0 %v235
        %v771 = vpop.f32.mrb[0].mxu0
        %v772 = vadd.f32 %v299, %v771
        %v773 = vpop.f32.mrb[0].mxu0
        %774 = vmatprep.mubr.f32.mxu0 0.0
        %775 = vmatmul.mubr.f32.gmra.mrb[0].mxu0 %v236
        %v776 = vpop.f32.mrb[0].mxu0
        %v777 = vadd.f32 %v299, %v776
        %v778 = vpop.f32.mrb[0].mxu0
        %779 = vmatprep.mubr.f32.mxu0 0.0
        %780 = vmatmul.mubr.f32.gmra.mrb[0].mxu0 %v237
        %v781 = vpop.f32.mrb[0].mxu0
        %v782 = vadd.f32 %v299, %v781
        %v783 = vpop.f32.mrb[0].mxu0
        %784 = vdwg.mxu0
        %785 = vst [vmem:[%s203] sm:$0xff] %v370
        %786 = vst [vmem:[%s203 + $0x8] sm:$0xff] %v372
        %787 = vst [vmem:[%s203 + $0x10] sm:$0xff] %v627
        %788 = vst [vmem:[%s203 + $0x18] sm:$0xff] %v376
        %789 = vst [vmem:[%s203 + $0x20] sm:$0xff] %v378
        %790 = vst [vmem:[%s203 + $0x28] sm:$0xff] %v632
        %791 = vst [vmem:[%s203 + $0x30] sm:$0xff] %v382
        %792 = vst [vmem:[%s203 + $0x38] sm:$0xff] %v384
        %793 = vst [vmem:[%s203 + $0x40] sm:$0xff] %v637
        %794 = vst [vmem:[%s203 + $0x48] sm:$0xff] %v388
        %795 = vst [vmem:[%s203 + $0x50] sm:$0xff] %v390
        %796 = vst [vmem:[%s203 + $0x58] sm:$0xff] %v642
        %797 = vst [vmem:[%s203 + $0x60] sm:$0xff] %v394
        %798 = vst [vmem:[%s203 + $0x68] sm:$0xff] %v396
        %799 = vst [vmem:[%s203 + $0x70] sm:$0xff] %v647
        %800 = vst [vmem:[%s203 + $0x78] sm:$0xff] %v400
        %801 = vst [vmem:[%s203 + $0x80] sm:$0xff] %v402
        %802 = vst [vmem:[%s203 + $0x88] sm:$0xff] %v652
        %803 = vst [vmem:[%s203 + $0x90] sm:$0xff] %v406
        %804 = vst [vmem:[%s203 + $0x98] sm:$0xff] %v408
        %805 = vst [vmem:[%s203 + $0xa0] sm:$0xff] %v657
        %806 = vst [vmem:[%s203 + $0xa8] sm:$0xff] %v412
        %807 = vst [vmem:[%s203 + $0xb0] sm:$0xff] %v414
        %808 = vst [vmem:[%s203 + $0xb8] sm:$0xff] %v662
        %809 = vst [vmem:[%s203 + $0xc0] sm:$0xff] %v418
        %810 = vst [vmem:[%s203 + $0xc8] sm:$0xff] %v420
        %811 = vst [vmem:[%s203 + $0xd0] sm:$0xff] %v667
        %812 = vst [vmem:[%s203 + $0xd8] sm:$0xff] %v424
        %813 = vst [vmem:[%s203 + $0xe0] sm:$0xff] %v426
        %814 = vst [vmem:[%s203 + $0xe8] sm:$0xff] %v672
        %815 = vst [vmem:[%s203 + $0xf0] sm:$0xff] %v430
        %816 = vst [vmem:[%s203 + $0xf8] sm:$0xff] %v432
        %817 = vst [vmem:[%s203 + $0x100] sm:$0xff] %v677
        %818 = vst [vmem:[%s203 + $0x108] sm:$0xff] %v436
        %819 = vst [vmem:[%s203 + $0x110] sm:$0xff] %v438
        %820 = vst [vmem:[%s203 + $0x118] sm:$0xff] %v682
        %821 = vst [vmem:[%s203 + $0x120] sm:$0xff] %v442
        %822 = vst [vmem:[%s203 + $0x128] sm:$0xff] %v444
        %823 = vst [vmem:[%s203 + $0x130] sm:$0xff] %v687
        %824 = vst [vmem:[%s203 + $0x138] sm:$0xff] %v448
        %825 = vst [vmem:[%s203 + $0x140] sm:$0xff] %v450
        %826 = vst [vmem:[%s203 + $0x148] sm:$0xff] %v692
        %827 = vst [vmem:[%s203 + $0x150] sm:$0xff] %v454
        %828 = vst [vmem:[%s203 + $0x158] sm:$0xff] %v456
        %829 = vst [vmem:[%s203 + $0x160] sm:$0xff] %v697
        %830 = vst [vmem:[%s203 + $0x168] sm:$0xff] %v460
        %831 = vst [vmem:[%s203 + $0x170] sm:$0xff] %v462
        %832 = vst [vmem:[%s203 + $0x178] sm:$0xff] %v702
        %833 = vst [vmem:[%s203 + $0x180] sm:$0xff] %v466
        %834 = vst [vmem:[%s203 + $0x188] sm:$0xff] %v468
        %835 = vst [vmem:[%s203 + $0x190] sm:$0xff] %v707
        %836 = vst [vmem:[%s203 + $0x198] sm:$0xff] %v472
        %837 = vst [vmem:[%s203 + $0x1a0] sm:$0xff] %v474
        %838 = vst [vmem:[%s203 + $0x1a8] sm:$0xff] %v712
        %839 = vst [vmem:[%s203 + $0x1b0] sm:$0xff] %v478
        %840 = vst [vmem:[%s203 + $0x1b8] sm:$0xff] %v480
        %841 = vst [vmem:[%s203 + $0x1c0] sm:$0xff] %v717
        %842 = vst [vmem:[%s203 + $0x1c8] sm:$0xff] %v484
        %843 = vst [vmem:[%s203 + $0x1d0] sm:$0xff] %v486
        %844 = vst [vmem:[%s203 + $0x1d8] sm:$0xff] %v722
        %845 = vst [vmem:[%s203 + $0x1e0] sm:$0xff] %v490
        %846 = vst [vmem:[%s203 + $0x1e8] sm:$0xff] %v492
        %847 = vst [vmem:[%s203 + $0x1f0] sm:$0xff] %v727
        %848 = vst [vmem:[%s203 + $0x1f8] sm:$0xff] %v496
        %849 = vst [vmem:[%s203 + $0x200] sm:$0xff] %v498
        %850 = vst [vmem:[%s203 + $0x208] sm:$0xff] %v732
        %851 = vst [vmem:[%s203 + $0x210] sm:$0xff] %v502
        %852 = vst [vmem:[%s203 + $0x218] sm:$0xff] %v504
        %853 = vst [vmem:[%s203 + $0x220] sm:$0xff] %v737
        %854 = vst [vmem:[%s203 + $0x228] sm:$0xff] %v508
        %855 = vst [vmem:[%s203 + $0x230] sm:$0xff] %v510
        %856 = vst [vmem:[%s203 + $0x238] sm:$0xff] %v742
        %857 = vst [vmem:[%s203 + $0x240] sm:$0xff] %v514
        %858 = vst [vmem:[%s203 + $0x248] sm:$0xff] %v516
        %859 = vst [vmem:[%s203 + $0x250] sm:$0xff] %v747
        %860 = vst [vmem:[%s203 + $0x258] sm:$0xff] %v520
        %861 = vst [vmem:[%s203 + $0x260] sm:$0xff] %v522
        %862 = vst [vmem:[%s203 + $0x268] sm:$0xff] %v752
        %863 = vst [vmem:[%s203 + $0x270] sm:$0xff] %v526
        %864 = vst [vmem:[%s203 + $0x278] sm:$0xff] %v528
        %865 = vst [vmem:[%s203 + $0x280] sm:$0xff] %v757
        %866 = vst [vmem:[%s203 + $0x288] sm:$0xff] %v532
        %867 = vst [vmem:[%s203 + $0x290] sm:$0xff] %v534
        %868 = vst [vmem:[%s203 + $0x298] sm:$0xff] %v762
        %869 = vst [vmem:[%s203 + $0x2a0] sm:$0xff] %v538
        %870 = vst [vmem:[%s203 + $0x2a8] sm:$0xff] %v540
        %871 = vst [vmem:[%s203 + $0x2b0] sm:$0xff] %v767
        %872 = vst [vmem:[%s203 + $0x2b8] sm:$0xff] %v544
        %873 = vst [vmem:[%s203 + $0x2c0] sm:$0xff] %v546
        %874 = vst [vmem:[%s203 + $0x2c8] sm:$0xff] %v772
        %875 = vst [vmem:[%s203 + $0x2d0] sm:$0xff] %v550
        %876 = vst [vmem:[%s203 + $0x2d8] sm:$0xff] %v552
        %877 = vst [vmem:[%s203 + $0x2e0] sm:$0xff] %v777
        %878 = vst [vmem:[%s203 + $0x2e8] sm:$0xff] %v556
        %879 = vst [vmem:[%s203 + $0x2f0] sm:$0xff] %v558
        %880 = vst [vmem:[%s203 + $0x2f8] sm:$0xff] %v782
        %s881 = sand.u32 %s97, 1
        %s882 = scalar_lea.sflag [#allocation4], %s881
        %s883 = sand.u32 %s97, 1
        %s884 = smul.addr %s883, 768
        %s885 = scalar_lea.vmem [#allocation7], %s884
        // Predicated region
        $region41: #{tpu_custom_call.1} parent=31 // pred_check
          %p886 = pneg %p107
        $region42: #{tpu_custom_call.1} parent=31 // pred_check_branch
          %888 = sbr.rel (%p886) target = $region44
        $region43: #{tpu_custom_call.1} parent=31 // pred_region
          %s889 = smul.u32 32, %s21
          %s891 = ssub.s32 12288, 12288
          %892 = vsyncadd %s882, %s891
          %s893 = smul.addr %s889, 3
          %s894 = smul.addr %s893, 128
          %s895 = scalar_lea.hbm %s3, %s894
          %s896 = sshll.u32 %s885, 4
          %s897 = int_to_ptr.vmem [resolvable:$true] %s896
          %902 = dma.vmem_to_hbm [thread:$0]  %s897, 12288, %s895, %s882, 384, 384, 24
        $region44: #{tpu_custom_call.1} parent=31 // pred_fallthru
          _
      $region32: #{tpu_custom_call.1} parent=5 // pred_fallthru
        _
      %p903 = scmp.le.s32.totalorder 2, %s16
      // Predicated region
      $region45: #{tpu_custom_call.1} parent=5 // pred_check
        %p904 = pneg %p903
      $region46: #{tpu_custom_call.1} parent=5 // pred_check_branch
        %906 = sbr.rel (%p904) target = $region48
      $region47: #{tpu_custom_call.1} parent=5 // pred_region
        %s907 = ssub.s32 %s16, 2
        // Predicated region
        $region49: #{tpu_custom_call.1} parent=47 // pred_check
          %p908 = pneg %p113
        $region50: #{tpu_custom_call.1} parent=47 // pred_check_branch
          %910 = sbr.rel (%p908) target = $region52
        $region51: #{tpu_custom_call.1} parent=47 // pred_region
          %s911 = sand.u32 %s98, 1
          %s912 = scalar_lea.sflag [#allocation4], %s911
          %s913 = sand.u32 %s98, 1
          %s914 = smul.addr %s913, 768
          %s915 = scalar_lea.vmem [#allocation7], %s914
          %916 = dma.done %s912, 12288
        $region52: #{tpu_custom_call.1} parent=47 // pred_fallthru
          _
      $region48: #{tpu_custom_call.1} parent=5 // pred_fallthru
        _
    $region6: #{tpu_custom_call.1} parent=1 // loop_footer
      %s20 = sadd.s32 1, %s16
    $region7: #{tpu_custom_call.1} parent=1 // loop_footer_branch
      %15 = sbr.rel target = $region3
    $region8: #{tpu_custom_call.1} parent=1 // loop_exit
      _
    %917 = vsyncpa [#allocation3], 1
    %s918 = scalar_lea.sflag [#allocation3], 1
    %919 = vsyncpa %s918, 1
    %920 = vsyncpa [#allocation6], 1
    %921 = vsyncpa [#allocation4], 1
    %s922 = scalar_lea.sflag [#allocation4], 1
    %923 = vsyncpa %s922, 1

</llo_original>
